<compile_context>
chip_gen: v6e
topology: v6e:2x2x1
jax: 0.10.0
libtpu: 0.0.40
codegen_flags: <defaults>
</compile_context>

<pallas_src>
import functools
import math

import jax
import jax.numpy as jnp
from jax.experimental import pallas as pl
from jax.experimental.pallas import tpu as pltpu

LN_EPS = 1e-5


def _default_vmem_limit():
    """Generation-aware scoped-VMEM request (~80% of physical capacity)."""
    try:
        cap = getattr(pltpu.get_tpu_info(), "vmem_capacity_bytes", None)
        if cap:
            return int(cap * 0.8)
    except Exception:
        pass
    return 64 * 1024 * 1024


VMEM_LIMIT = _default_vmem_limit()


def _bspec(shape, index_map, *, buffers=None):
    """BlockSpec with an optional explicit buffer count.

    buffers=1 -> single-buffer constant-index weights (halves weight residency);
    buffers=3 -> deeper pipelining for streamed K/V tiles.  Falls back to the
    default double-buffered spec if this JAX build lacks pipeline_mode.
    """
    if buffers is not None:
        try:
            return pl.BlockSpec(shape, index_map,
                                pipeline_mode=pl.Buffered(buffers))
        except Exception:  # pragma: no cover - older JAX without pipeline_mode
            pass
    return pl.BlockSpec(shape, index_map)


def _pick_n_tile(n, cap=2048):
    """Largest multiple of 128 <= cap that divides n (else n itself)."""
    if n <= cap:
        return n
    t = (cap // 128) * 128
    while t >= 128:
        if n % t == 0:
            return t
        t -= 128
    return n


def _layernorm(v, g, b):
    mu = jnp.mean(v, axis=-1, keepdims=True)
    var = jnp.mean((v - mu) ** 2, axis=-1, keepdims=True)
    return (v - mu) * jax.lax.rsqrt(var + LN_EPS) * g + b


# ---------------------------------------------------------------------------
# Kernel 1: row-tiled LayerNorm + matmul (qkv projection and lm head),
# N (output-feature) dimension tiled so weights are streamed, not resident.
# ---------------------------------------------------------------------------
def ln_matmul_kernel(x_ref, g_ref, b_ref, w_ref, o_ref, *, compute_dtype):
    x = x_ref[...].astype(jnp.float32)                                 # (R, C)
    h = _layernorm(x, g_ref[...].astype(jnp.float32),
                   b_ref[...].astype(jnp.float32))
    o_ref[...] = jnp.dot(h.astype(compute_dtype), w_ref[...],
                         preferred_element_type=jnp.float32).astype(o_ref.dtype)


def ln_matmul(x, g, b, w, *, block_rows, out_dtype,
              compute_dtype=jnp.bfloat16, n_tile_cap=2048):
    """x: (B, T, C), w: (C, N) [already bf16] -> LayerNorm(x) @ w : (B, T, N)."""
    B, T, C = x.shape
    N = w.shape[1]
    block_rows = min(block_rows, T)
    tn = _pick_n_tile(N, n_tile_cap)
    grid = (B, pl.cdiv(T, block_rows), pl.cdiv(N, tn))

    flops = 2 * B * T * C * N + 10 * B * T * C
    bytes_accessed = (4 * B * T * C + w.dtype.itemsize * C * N
                      + jnp.dtype(out_dtype).itemsize * B * T * N)

    kernel = functools.partial(ln_matmul_kernel, compute_dtype=compute_dtype)
    return pl.pallas_call(
        kernel,
        out_shape=jax.ShapeDtypeStruct((B, T, N), out_dtype),
        grid_spec=pltpu.PrefetchScalarGridSpec(
            num_scalar_prefetch=0,
            grid=grid,
            in_specs=[
                # x tile is constant across the innermost N axis -> fetched once.
                pl.BlockSpec((None, block_rows, C), lambda bb, r, n: (bb, r, 0)),
                _bspec((1, C), lambda bb, r, n: (0, 0), buffers=1),      # gamma
                _bspec((1, C), lambda bb, r, n: (0, 0), buffers=1),      # beta
                pl.BlockSpec((C, tn), lambda bb, r, n: (0, n)),          # weight (streamed)
            ],
            out_specs=pl.BlockSpec((None, block_rows, tn),
                                   lambda bb, r, n: (bb, r, n)),
        ),
        compiler_params=pltpu.CompilerParams(
            dimension_semantics=("parallel", "parallel", "parallel"),
            vmem_limit_bytes=VMEM_LIMIT),
        cost_estimate=pl.CostEstimate(flops=flops, transcendentals=B * T,
                                      bytes_accessed=bytes_accessed),
    )(x, g, b, w)


# ---------------------------------------------------------------------------
# Kernel 2: flash attention over kv tiles + fused proj/residual/ln_2/MLP
# ---------------------------------------------------------------------------
def attn_mlp_kernel(x_ref, q_ref, kt_ref, v_ref, wproj_ref, g2_ref, b2_ref,
                    wfc_ref, wfcp_ref, o_ref, m_scr, l_scr, acc_scr,
                    *, compute_dtype, mlp_chunk):
    ki = pl.program_id(2)
    nk = pl.num_programs(2)

    @pl.when(ki == 0)
    def _init():
        m_scr[...] = jnp.full(m_scr.shape, -jnp.inf, dtype=m_scr.dtype)
        l_scr[...] = jnp.zeros(l_scr.shape, dtype=l_scr.dtype)
        acc_scr[...] = jnp.zeros(acc_scr.shape, dtype=acc_scr.dtype)

    # ---- one flash step over this K/V tile (all heads in one batched einsum).
    # 1/sqrt(head_dim) is already folded into the q columns of W_attn.
    q = q_ref[...].astype(compute_dtype)       # (H, TQ, D)
    kt = kt_ref[...].astype(compute_dtype)     # (H, D, TK)  pre-transposed
    v = v_ref[...].astype(compute_dtype)       # (H, TK, D)

    s = jnp.einsum('hqd,hdk->hqk', q, kt,
                   preferred_element_type=jnp.float32)   # (H, TQ, TK), f32

    m_prev = m_scr[...]
    m_new = jnp.maximum(m_prev, jnp.max(s, axis=-1, keepdims=True))
    alpha = jnp.exp(m_prev - m_new)
    p = jnp.exp(s - m_new)
    l_scr[...] = alpha * l_scr[...] + jnp.sum(p, axis=-1, keepdims=True)
    acc_scr[...] = alpha * acc_scr[...] + jnp.einsum(
        'hqk,hkd->hqd', p.astype(compute_dtype), v,
        preferred_element_type=jnp.float32)
    m_scr[...] = m_new

    # ---- finalize: wide output projection + residual + ln_2 + chunked MLP ----
    @pl.when(ki == nk - 1)
    def _finalize():
        n_head, tq, _ = acc_scr.shape
        c = wproj_ref.shape[1]
        y = acc_scr[...] / l_scr[...]                      # exact normalisation
        # Merge heads along lanes -> (TQ, C), then ONE (TQ,C)@(C,C) MXU matmul
        # (K = C contraction; no per-head K=64 dots, no cross-sublane head sum).
        y2 = jnp.concatenate([y[h] for h in range(n_head)], axis=-1)
        attn_out = jnp.dot(y2.astype(compute_dtype), wproj_ref[...],
                           preferred_element_type=jnp.float32)     # (TQ, C)
        x1 = x_ref[...].astype(jnp.float32) + attn_out

        h2 = _layernorm(x1, g2_ref[...].astype(jnp.float32),
                        b2_ref[...].astype(jnp.float32))
        h2c = h2.astype(compute_dtype)

        # Chunk the 4C hidden dim: fc-slice -> erf GELU -> accumulate second
        # matmul, keeping the live intermediates at (TQ, chunk).
        d_ff = wfc_ref.shape[1]
        chunk = mlp_chunk if (mlp_chunk and d_ff % mlp_chunk == 0) else d_ff
        n_chunks = d_ff // chunk
        inv_sqrt2 = 1.0 / math.sqrt(2.0)

        def mlp_step(ci, acc):
            off = ci * chunk
            if chunk % 128 == 0:
                off = pl.multiple_of(off, 128)
            fc = jnp.dot(h2c, wfc_ref[:, pl.ds(off, chunk)],
                         preferred_element_type=jnp.float32)       # (TQ, chunk)
            act = 0.5 * fc * (1.0 + jax.lax.erf(fc * inv_sqrt2))   # exact GELU
            return acc + jnp.dot(act.astype(compute_dtype),
                                 wfcp_ref[pl.ds(off, chunk), :],
                                 preferred_element_type=jnp.float32)

        mlp = jax.lax.fori_loop(0, n_chunks, mlp_step,
                                jnp.zeros((tq, c), jnp.float32), unroll=True)
        o_ref[...] = (x1 + mlp).astype(o_ref.dtype)


def block_forward(x, block_params, *, n_head, tq=128, tk=128, row_block=128,
                  mlp_chunk=512, compute_dtype=jnp.bfloat16):
    """One transformer Block (weights already prepared: bf16, q-scale folded)."""
    ln1_g, ln1_b, w_attn, w_proj, ln2_g, ln2_b, w_fc, w_fcp = block_params
    B, T, C = x.shape
    head_dim = C // n_head
    tq, tk = min(tq, T), min(tk, T)
    assert T % tq == 0 and T % tk == 0, "sequence must divide the tile sizes"

    # (1) qkv = ln_1(x) @ W_attn (1/sqrt(D) already folded into q columns).
    qkv = ln_matmul(x, ln1_g, ln1_b, w_attn, block_rows=row_block,
                    out_dtype=compute_dtype, compute_dtype=compute_dtype)

    # Wrapper-side layout plumbing (plain XLA): split heads once; K is
    # pre-transposed to (B, H, D, T) for a lane-dense (D, TK) matmul RHS.
    q = qkv[..., :C].reshape(B, T, n_head, head_dim).transpose(0, 2, 1, 3)
    kt = qkv[..., C:2 * C].reshape(B, T, n_head, head_dim).transpose(0, 2, 3, 1)
    v = qkv[..., 2 * C:].reshape(B, T, n_head, head_dim).transpose(0, 2, 1, 3)

    grid = (B, T // tq, T // tk)
    flops = (4 * B * T * T * C          # q@k^T and p@v
             + 2 * B * T * C * C        # output projection
             + 16 * B * T * C * C)      # MLP C->4C->C
    transcendentals = B * n_head * T * T + 4 * B * T * C
    bytes_accessed = (8 * B * T * C                 # x in + out (f32)
                      + 2 * B * T * 3 * C           # q/k/v heads (bf16)
                      + 2 * (C * C + 8 * C * C))    # weights (bf16)

    kernel = functools.partial(attn_mlp_kernel, compute_dtype=compute_dtype,
                               mlp_chunk=mlp_chunk)
    return pl.pallas_call(
        kernel,
        out_shape=jax.ShapeDtypeStruct((B, T, C), x.dtype),
        grid_spec=pltpu.PrefetchScalarGridSpec(
            num_scalar_prefetch=0,
            grid=grid,
            in_specs=[
                pl.BlockSpec((None, tq, C), lambda b, qi, ki: (b, qi, 0)),        # x
                pl.BlockSpec((None, n_head, tq, head_dim),
                             lambda b, qi, ki: (b, 0, qi, 0)),                    # q heads
                _bspec((None, n_head, head_dim, tk),
                       lambda b, qi, ki: (b, 0, 0, ki), buffers=3),               # k^T heads
                _bspec((None, n_head, tk, head_dim),
                       lambda b, qi, ki: (b, 0, ki, 0), buffers=3),               # v heads
                _bspec((C, C), lambda b, qi, ki: (0, 0), buffers=1),              # W_proj
                _bspec((1, C), lambda b, qi, ki: (0, 0), buffers=1),              # ln_2 gamma
                _bspec((1, C), lambda b, qi, ki: (0, 0), buffers=1),              # ln_2 beta
                _bspec((C, 4 * C), lambda b, qi, ki: (0, 0), buffers=1),          # W_fc
                _bspec((4 * C, C), lambda b, qi, ki: (0, 0), buffers=1),          # W_fc_proj
            ],
            out_specs=pl.BlockSpec((None, tq, C), lambda b, qi, ki: (b, qi, 0)),
            scratch_shapes=[
                pltpu.VMEM((n_head, tq, 1), jnp.float32),          # running max
                pltpu.VMEM((n_head, tq, 1), jnp.float32),          # running denom
                pltpu.VMEM((n_head, tq, head_dim), jnp.float32),   # running numerator
            ],
        ),
        compiler_params=pltpu.CompilerParams(
            dimension_semantics=("parallel", "parallel", "arbitrary"),
            vmem_limit_bytes=VMEM_LIMIT),
        cost_estimate=pl.CostEstimate(flops=flops,
                                      transcendentals=transcendentals,
                                      bytes_accessed=bytes_accessed),
    )(x, q, kt, v, w_proj, ln2_g, ln2_b, w_fc, w_fcp)


# ---------------------------------------------------------------------------
# Parameter preparation (one-time): bf16 weights + fold 1/sqrt(D) into W_attn
# ---------------------------------------------------------------------------
def prepare_params(raw, n_head, compute_dtype=jnp.bfloat16):
    def prep_block(bp):
        ln1_g, ln1_b, w_attn, w_proj, ln2_g, ln2_b, w_fc, w_fcp = bp
        C = w_attn.shape[0]
        qscale = 1.0 / math.sqrt(C // n_head)
        col_scale = jnp.concatenate([jnp.full((C,), qscale, jnp.float32),
                                     jnp.ones((2 * C,), jnp.float32)])
        return (ln1_g, ln1_b,
                (w_attn * col_scale[None, :]).astype(compute_dtype),
                w_proj.astype(compute_dtype),
                ln2_g, ln2_b,
                w_fc.astype(compute_dtype),
                w_fcp.astype(compute_dtype))

    return dict(
        wte=raw['wte'], wpe=raw['wpe'],
        blocks=[prep_block(bp) for bp in raw['blocks']],
        lnf_g=raw['lnf_g'], lnf_b=raw['lnf_b'],
        w_lm=raw['w_lm'].astype(compute_dtype))


# ---------------------------------------------------------------------------
# Full GPTModel forward (inference path: targets=None -> last-position logits)
# ---------------------------------------------------------------------------
def gpt_forward(idx, prepared, config, *, compute_dtype=jnp.bfloat16):
    B, T = idx.shape
    C = config['n_embd']
    assert T <= config['block_size']
    # TODO(synk): token/position embedding gather is plain jnp.take (data-
    # dependent gather), not a Pallas kernel.
    x = jnp.take(prepared['wte'], idx, axis=0) + prepared['wpe'][:T][None]
    # transformer.drop: identity (dropout = 0 / eval)
    for bp in prepared['blocks']:
        x = block_forward(x, bp, n_head=config['n_head'],
                          compute_dtype=compute_dtype)
    # LM head on the last position only.  Collapse batch into the row dim so
    # there is a single grid step with dense stores (not B M=1 matmuls).
    x_last = x[:, -1:, :].reshape(1, B, C)
    logits = ln_matmul(x_last, prepared['lnf_g'], prepared['lnf_b'],
                       prepared['w_lm'], block_rows=B, out_dtype=jnp.float32,
                       compute_dtype=compute_dtype)                 # (1, B, V)
    return logits.reshape(B, 1, -1)


# ---------------------------------------------------------------------------
# Pure-JAX reference (f32) of the PyTorch module (dropout identity, no mask)
# ---------------------------------------------------------------------------
def _ln_ref(v, g, b):
    mu = jnp.mean(v, axis=-1, keepdims=True)
    var = jnp.mean((v - mu) ** 2, axis=-1, keepdims=True)
    return (v - mu) / jnp.sqrt(var + LN_EPS) * g[0] + b[0]


def block_reference(x, block_params, n_head):
    ln1_g, ln1_b, w_attn, w_proj, ln2_g, ln2_b, w_fc, w_fcp = block_params
    B, T, C = x.shape
    hd = C // n_head
    h = _ln_ref(x, ln1_g, ln1_b)
    qkv = h @ w_attn
    q, k, v = jnp.split(qkv, 3, axis=-1)
    q = q.reshape(B, T, n_head, hd).transpose(0, 2, 1, 3)
    k = k.reshape(B, T, n_head, hd).transpose(0, 2, 1, 3)
    v = v.reshape(B, T, n_head, hd).transpose(0, 2, 1, 3)
    att = (q @ k.transpose(0, 1, 3, 2)) * (1.0 / math.sqrt(hd))
    att = jax.nn.softmax(att, axis=-1)       # no causal mask (matches the spec)
    y = (att @ v).transpose(0, 2, 1, 3).reshape(B, T, C)
    x = x + y @ w_proj
    h2 = _ln_ref(x, ln2_g, ln2_b)
    fc = h2 @ w_fc
    act = 0.5 * fc * (1.0 + jax.lax.erf(fc / math.sqrt(2.0)))
    return x + act @ w_fcp


def gpt_reference(idx, params, config):
    T = idx.shape[1]
    x = jnp.take(params['wte'], idx, axis=0) + params['wpe'][:T][None]
    for bp in params['blocks']:
        x = block_reference(x, bp, config['n_head'])
    x_last = x[:, -1:, :]
    return _ln_ref(x_last, params['lnf_g'], params['lnf_b']) @ params['w_lm']


if __name__ == "__main__":
    cfg = dict(vocab_size=512, block_size=256, n_layer=2, n_head=4,
               n_embd=256, dropout=0.0)
    B, T = 2, 256
    C = cfg['n_embd']
    std = 0.02  # matches GPTModel._init_weights

    root = jax.random.PRNGKey(0)
    kk = iter(jax.random.split(root, 3 + 4 * cfg['n_layer'] + 1))
    nrm = lambda shape: std * jax.random.normal(next(kk), shape, dtype=jnp.float32)

    blocks = []
    for _ in range(cfg['n_layer']):
        blocks.append((
            jnp.ones((1, C), jnp.float32), jnp.zeros((1, C), jnp.float32),  # ln_1
            nrm((C, 3 * C)),                                                # c_attn
            nrm((C, C)),                                                    # c_proj
            jnp.ones((1, C), jnp.float32), jnp.zeros((1, C), jnp.float32),  # ln_2
            nrm((C, 4 * C)),                                                # mlp.c_fc
            nrm((4 * C, C)),                                                # mlp.c_proj
        ))
    params = dict(
        wte=nrm((cfg['vocab_size'], C)),
        wpe=nrm((cfg['block_size'], C)),
        blocks=blocks,
        lnf_g=jnp.ones((1, C), jnp.float32),
        lnf_b=jnp.zeros((1, C), jnp.float32),
        w_lm=nrm((C, cfg['vocab_size'])),
    )
    idx = jax.random.randint(next(kk), (B, T), 0, cfg['vocab_size'],
                             dtype=jnp.int32)

    prepared = prepare_params(params, cfg['n_head'])

    # --- single-block check -------------------------------------------------
    x0 = jnp.take(params['wte'], idx, axis=0) + params['wpe'][:T][None]
    blk = jax.block_until_ready(
        block_forward(x0, prepared['blocks'][0], n_head=cfg['n_head']))
    blk_ref = block_reference(x0, blocks[0], cfg['n_head'])
    assert blk.shape == (B, T, C)
    assert jnp.allclose(blk, blk_ref, atol=2e-2, rtol=2e-2), "block mismatch"

    # --- full GPT forward (targets=None path) -------------------------------
    logits = jax.block_until_ready(gpt_forward(idx, prepared, cfg))
    ref_logits = gpt_reference(idx, params, cfg)
    assert logits.shape == (B, 1, cfg['vocab_size'])
    assert jnp.allclose(logits, ref_logits, atol=2e-2, rtol=2e-2), \
        "logits mismatch vs reference"

    print("KERNEL_OK")
</pallas_src>

<mosaic_0001>
module attributes {stable_mosaic.version = 11 : i64} {
  func.func @ln_matmul_kernel(%arg0: i32, %arg1: i32, %arg2: i32, %arg3: memref<1x128x256xf32, #tpu.memory_space<vmem>>, %arg4: memref<1x256xf32, #tpu.memory_space<vmem>>, %arg5: memref<1x256xf32, #tpu.memory_space<vmem>>, %arg6: memref<256x768xbf16, #tpu.memory_space<vmem>>, %arg7: memref<1x128x768xbf16, #tpu.memory_space<vmem>>) attributes {dimension_semantics = [#tpu.dimension_semantics<parallel>, #tpu.dimension_semantics<parallel>, #tpu.dimension_semantics<parallel>], iteration_bounds = array<i64: 2, 2, 1>, scalar_prefetch = 0 : i64, scratch_operands = 0 : i64, tpu.core_type = #tpu.core_type<tc>, window_params = [{transform_indices = @transform_0, window_bounds = array<i64: 1, 128, 256>}, {pipeline_mode = #tpu.pipeline_mode<synchronous>, transform_indices = @transform_1, window_bounds = array<i64: 1, 256>}, {pipeline_mode = #tpu.pipeline_mode<synchronous>, transform_indices = @transform_2, window_bounds = array<i64: 1, 256>}, {transform_indices = @transform_3, window_bounds = array<i64: 256, 768>}, {transform_indices = @transform_4, window_bounds = array<i64: 1, 128, 768>}]} {
    %c0 = arith.constant 0 : index
    %c0_0 = arith.constant 0 : index
    %c0_1 = arith.constant 0 : index
    %0 = vector.load %arg3[%c0, %c0_0, %c0_1] : memref<1x128x256xf32, #tpu.memory_space<vmem>>, vector<1x128x256xf32>
    %1 = vector.shape_cast %0 : vector<1x128x256xf32> to vector<128x256xf32>
    %c0_2 = arith.constant 0 : index
    %c0_3 = arith.constant 0 : index
    %2 = vector.load %arg4[%c0_2, %c0_3] : memref<1x256xf32, #tpu.memory_space<vmem>>, vector<1x256xf32>
    %c0_4 = arith.constant 0 : index
    %c0_5 = arith.constant 0 : index
    %3 = vector.load %arg5[%c0_4, %c0_5] : memref<1x256xf32, #tpu.memory_space<vmem>>, vector<1x256xf32>
    %cst = arith.constant dense<0.000000e+00> : vector<128xf32>
    %4 = vector.multi_reduction <add>, %1, %cst [1] : vector<128x256xf32> to vector<128xf32>
    %5 = vector.shape_cast %4 : vector<128xf32> to vector<128x1xf32>
    %cst_6 = arith.constant 2.560000e+02 : f32
    %6 = vector.broadcast %cst_6 : f32 to vector<128x1xf32>
    %7 = arith.divf %5, %6 : vector<128x1xf32>
    %8 = vector.broadcast %7 : vector<128x1xf32> to vector<128x256xf32>
    %9 = arith.subf %1, %8 : vector<128x256xf32>
    %10 = arith.mulf %9, %9 : vector<128x256xf32>
    %cst_7 = arith.constant dense<0.000000e+00> : vector<128xf32>
    %11 = vector.multi_reduction <add>, %10, %cst_7 [1] : vector<128x256xf32> to vector<128xf32>
    %12 = vector.shape_cast %11 : vector<128xf32> to vector<128x1xf32>
    %cst_8 = arith.constant 2.560000e+02 : f32
    %13 = vector.broadcast %cst_8 : f32 to vector<128x1xf32>
    %14 = arith.divf %12, %13 : vector<128x1xf32>
    %15 = vector.broadcast %7 : vector<128x1xf32> to vector<128x256xf32>
    %16 = arith.subf %1, %15 : vector<128x256xf32>
    %cst_9 = arith.constant 9.99999974E-6 : f32
    %17 = vector.broadcast %cst_9 : f32 to vector<128x1xf32>
    %18 = arith.addf %14, %17 : vector<128x1xf32>
    %19 = math.rsqrt %18 : vector<128x1xf32>
    %20 = vector.broadcast %19 : vector<128x1xf32> to vector<128x256xf32>
    %21 = arith.mulf %16, %20 : vector<128x256xf32>
    %22 = vector.broadcast %2 : vector<1x256xf32> to vector<128x256xf32>
    %23 = arith.mulf %21, %22 : vector<128x256xf32>
    %24 = vector.broadcast %3 : vector<1x256xf32> to vector<128x256xf32>
    %25 = arith.addf %23, %24 : vector<128x256xf32>
    %26 = arith.truncf %25 : vector<128x256xf32> to vector<128x256xbf16>
    %c0_10 = arith.constant 0 : index
    %c0_11 = arith.constant 0 : index
    %27 = vector.load %arg6[%c0_10, %c0_11] : memref<256x768xbf16, #tpu.memory_space<vmem>>, vector<256x768xbf16>
    %cst_12 = arith.constant dense<0.000000e+00> : vector<128x768xf32>
    %28 = tpu.matmul %26, %27, %cst_12 {dimension_numbers = #tpu.dot_dimension_numbers<[1], [0], [0], [1], [0, 0, 1, 1], [], []>} : vector<128x256xbf16>, vector<256x768xbf16>, vector<128x768xf32> -> vector<128x768xf32>
    %29 = arith.truncf %28 : vector<128x768xf32> to vector<128x768xbf16>
    %c0_13 = arith.constant 0 : index
    %c0_14 = arith.constant 0 : index
    %c0_15 = arith.constant 0 : index
    %30 = vector.load %arg7[%c0_13, %c0_14, %c0_15] : memref<1x128x768xbf16, #tpu.memory_space<vmem>>, vector<1x128x768xbf16>
    %31 = vector.shape_cast %30 : vector<1x128x768xbf16> to vector<128x768xbf16>
    %32 = vector.shape_cast %29 : vector<128x768xbf16> to vector<1x128x768xbf16>
    tpu.vector_store %arg7[%c0_13, %c0_14, %c0_15], %32 {strides = array<i32>} : memref<1x128x768xbf16, #tpu.memory_space<vmem>>, vector<1x128x768xbf16>,
    return
  }
  func.func @transform_0(%arg0: i32, %arg1: i32, %arg2: i32) -> (i32, i32, i32) {
    %c0_i32 = arith.constant 0 : i32
    %c0_i32_0 = arith.constant 0 : i32
    return %arg0, %arg1, %c0_i32 : i32, i32, i32
  }
  func.func @transform_1(%arg0: i32, %arg1: i32, %arg2: i32) -> (i32, i32) {
    %c0_i32 = arith.constant 0 : i32
    %c0_i32_0 = arith.constant 0 : i32
    %c0_i32_1 = arith.constant 0 : i32
    return %c0_i32, %c0_i32_0 : i32, i32
  }
  func.func @transform_2(%arg0: i32, %arg1: i32, %arg2: i32) -> (i32, i32) {
    %c0_i32 = arith.constant 0 : i32
    %c0_i32_0 = arith.constant 0 : i32
    %c0_i32_1 = arith.constant 0 : i32
    return %c0_i32, %c0_i32_0 : i32, i32
  }
  func.func @transform_3(%arg0: i32, %arg1: i32, %arg2: i32) -> (i32, i32) {
    %c0_i32 = arith.constant 0 : i32
    %c0_i32_0 = arith.constant 0 : i32
    return %c0_i32, %arg2 : i32, i32
  }
  func.func @transform_4(%arg0: i32, %arg1: i32, %arg2: i32) -> (i32, i32, i32) {
    %c0_i32 = arith.constant 0 : i32
    return %arg0, %arg1, %arg2 : i32, i32, i32
  }
}

</mosaic_0001>

<llo_original>
// kernel: tpu_custom_call.1
$region0: #{tpu_custom_call.1}
  #allocation0 [shape = 'u32[]', space=smem, size = 0x4, offset = 0x4, fixed_abs, tag = 'smem constant byte address 0x4 - core index']
  #allocation1 [shape = 'u32[144,128]{1,0:T(1,128)}', space=vmem, size = 0x12000, scoped, tag = 'internal scratch']
  %s0 = inlined_call_operand.hbm [shape: f32[2,256,256], index: 0, kind: input, shape index: {}]
  %s1 = inlined_call_operand.hbm [shape: f32[1,256], index: 1, kind: input, shape index: {}]
  %s2 = inlined_call_operand.vmem [shape: f32[1,256], index: 2, kind: input, shape index: {}]
  %s3 = inlined_call_operand.hbm [shape: bf16[256,768], index: 3, kind: input, shape index: {}]
  %s4 = inlined_call_operand.hbm [shape: bf16[2,256,768], index: 4, kind: output, shape index: {}]
  %s5 = sld [smem:[#allocation0]]
  $region61: #{tpu_custom_call.1} parent=0
    _
  %s7 = ssub.s32 1, %s5
  %s8 = scalar_select 0, %s7, %s5
  $region1: #{tpu_custom_call.1} parent=0
    #allocation2 [shape = 'u8[262144]{0}', space=vmem, size = 0x40000, scoped, tag = 'input window, operand 0']
    #allocation3 [shape = 's32[2]{0}', space=sflag, size = 0x8, scoped, tag = 'scoped memory for tpu_custom_call.1']
    #allocation4 [shape = 's32[2]{0}', space=sflag, size = 0x8, scoped, tag = 'scoped memory for tpu_custom_call.1']
    #allocation5 [shape = 'u8[1024]{0}', space=vmem, size = 0x400, scoped, tag = 'input window, operand 1, single buffered']
    #allocation6 [shape = 's32[1]{0}', space=sflag, size = 0x4, scoped, tag = 'scoped memory for tpu_custom_call.1']
    #allocation7 [shape = 'u8[393216]{0}', space=vmem, size = 0x60000, scoped, tag = 'input window, operand 3, single buffered']
    #allocation8 [shape = 'u8[393216]{0}', space=vmem, size = 0x60000, scoped, tag = 'output window, operand 0']
    %9 = vsyncpa [#allocation3], 0
    %s10 = scalar_lea.sflag [#allocation3], 1
    %11 = vsyncpa %s10, 0
    %12 = vsyncpa [#allocation6], 0
    %13 = vsyncpa [#allocation4], 0
    %s14 = scalar_lea.sflag [#allocation4], 1
    %15 = vsyncpa %s14, 0
    loop: start=0, step=1, limit=6
    $region2: #{tpu_custom_call.1} parent=1 // loop_pre_header
      _
    $region3: #{tpu_custom_call.1} parent=1 // loop_header
      %s17 = sphi 0, %s21
      %p18 = scmp.ge.s32.totalorder %s17, 6
      %s24 = sphi 0, %s43
      %s25 = sphi 0, %s39
      %s26 = sphi 0, %s35
      %s27 = sphi 0, %s24
      %s28 = sphi 0, %s25
      %s29 = sphi 0, %s26
      %s30 = sphi 0, %s27
      %s31 = sphi 0, %s28
      %s32 = sphi 0, %s29
      %s48 = sphi 0, %s50
      %s51 = sphi 0, %s48
      %s52 = sphi 0, %s51
      %s68 = sphi 0, %s52
      %s72 = sphi 0, %s72
      %s74 = sphi 0, %s72
      %s75 = sphi 0, %s74
      %s89 = sphi 0, %s75
      %s93 = sphi 0, %s93
      %s95 = sphi 0, %s93
      %s96 = sphi 0, %s95
      %s110 = sphi 0, %s96
      %s116 = sphi 0, %s118
      %s119 = sphi 0, %s116
      %s120 = sphi 0, %s119
      %s136 = sphi 0, %s120
      %s146 = sphi 0, %s148
      %s149 = sphi 0, %s146
      %s150 = sphi 0, %s149
      %s166 = sphi 0, %s150
    $region4: #{tpu_custom_call.1} parent=1 // loop_header_branch
      %20 = sbr.rel (%p18) target = $region8
    $region5: #{tpu_custom_call.1} parent=1 // loop_body
      %s22 = ssub.s32 %s17, 1
      %s23 = ssub.s32 %s17, 2
      %s33 = sadd.s32 1, %s26
      %p34 = scmp.ge.s32.totalorder %s33, 1
      %s35 = scalar_select %p34, 0, %s33
      %s36 = sadd.s32 1, %s25
      %s37 = scalar_select %p34, %s36, %s25
      %p38 = scmp.ge.s32.totalorder %s37, 2
      %s39 = scalar_select %p38, 0, %s37
      %s40 = sadd.s32 1, %s24
      %s41 = scalar_select %p38, %s40, %s24
      %p42 = scmp.ge.s32.totalorder %s41, 2
      %s43 = scalar_select %p42, 0, %s41
      %s44 = ssub.s32 %s24, %s43
      %s45 = ssub.s32 %s25, %s39
      %s46 = sor.u32 %s44, %s45
      %p47 = scmp.eq.s32.totalorder %s46, 0
      %s49 = sadd.s32 %s48, 1
      %s50 = scalar_select %p47, %s48, %s49
      %p53 = pneg %p47
      %p54 = scmp.eq.s32.totalorder %s17, 3
      %p55 = por %p53, %p54
      %p56 = scmp.ne.s32.totalorder %s48, %s51
      %p57 = scmp.eq.s32.totalorder %s17, 0
      %p58 = por %p56, %p57
      %p59 = scmp.ne.s32.totalorder %s48, %s51
      %p60 = scmp.eq.s32.totalorder %s22, 3
      %p61 = por %p59, %p60
      %p62 = scmp.ne.s32.totalorder %s51, %s52
      %p63 = scmp.eq.s32.totalorder %s22, 0
      %p64 = por %p62, %p63
      %p65 = scmp.ne.s32.totalorder %s51, %s52
      %p66 = scmp.eq.s32.totalorder %s23, 3
      %p67 = por %p65, %p66
      %p69 = scmp.ne.s32.totalorder %s52, %s68
      %p70 = scmp.eq.s32.totalorder %s23, 0
      %p71 = por %p69, %p70
      %s73 = sadd.s32 %s72, 1
      %p76 = scmp.eq.s32.totalorder %s17, 3
      %p77 = scmp.ne.s32.totalorder %s72, %s74
      %p78 = scmp.eq.s32.totalorder %s17, 0
      %p79 = por %p77, %p78
      %p80 = scmp.ne.s32.totalorder %s72, %s74
      %p81 = scmp.eq.s32.totalorder %s22, 3
      %p82 = por %p80, %p81
      %p83 = scmp.ne.s32.totalorder %s74, %s75
      %p84 = scmp.eq.s32.totalorder %s22, 0
      %p85 = por %p83, %p84
      %p86 = scmp.ne.s32.totalorder %s74, %s75
      %p87 = scmp.eq.s32.totalorder %s23, 3
      %p88 = por %p86, %p87
      %p90 = scmp.ne.s32.totalorder %s75, %s89
      %p91 = scmp.eq.s32.totalorder %s23, 0
      %p92 = por %p90, %p91
      %s94 = sadd.s32 %s93, 1
      %p97 = scmp.eq.s32.totalorder %s17, 3
      %p98 = scmp.ne.s32.totalorder %s93, %s95
      %p99 = scmp.eq.s32.totalorder %s17, 0
      %p100 = por %p98, %p99
      %p101 = scmp.ne.s32.totalorder %s93, %s95
      %p102 = scmp.eq.s32.totalorder %s22, 3
      %p103 = por %p101, %p102
      %p104 = scmp.ne.s32.totalorder %s95, %s96
      %p105 = scmp.eq.s32.totalorder %s22, 0
      %p106 = por %p104, %p105
      %p107 = scmp.ne.s32.totalorder %s95, %s96
      %p108 = scmp.eq.s32.totalorder %s23, 3
      %p109 = por %p107, %p108
      %p111 = scmp.ne.s32.totalorder %s96, %s110
      %p112 = scmp.eq.s32.totalorder %s23, 0
      %p113 = por %p111, %p112
      %s114 = ssub.s32 %s26, %s35
      %p115 = scmp.eq.s32.totalorder %s114, 0
      %s117 = sadd.s32 %s116, 1
      %s118 = scalar_select %p115, %s116, %s117
      %p121 = pneg %p115
      %p122 = scmp.eq.s32.totalorder %s17, 3
      %p123 = por %p121, %p122
      %p124 = scmp.ne.s32.totalorder %s116, %s119
      %p125 = scmp.eq.s32.totalorder %s17, 0
      %p126 = por %p124, %p125
      %p127 = scmp.ne.s32.totalorder %s116, %s119
      %p128 = scmp.eq.s32.totalorder %s22, 3
      %p129 = por %p127, %p128
      %p130 = scmp.ne.s32.totalorder %s119, %s120
      %p131 = scmp.eq.s32.totalorder %s22, 0
      %p132 = por %p130, %p131
      %p133 = scmp.ne.s32.totalorder %s119, %s120
      %p134 = scmp.eq.s32.totalorder %s23, 3
      %p135 = por %p133, %p134
      %p137 = scmp.ne.s32.totalorder %s120, %s136
      %p138 = scmp.eq.s32.totalorder %s23, 0
      %p139 = por %p137, %p138
      %s140 = ssub.s32 %s24, %s43
      %s141 = ssub.s32 %s25, %s39
      %s142 = sor.u32 %s140, %s141
      %s143 = ssub.s32 %s26, %s35
      %s144 = sor.u32 %s142, %s143
      %p145 = scmp.eq.s32.totalorder %s144, 0
      %s147 = sadd.s32 %s146, 1
      %s148 = scalar_select %p145, %s146, %s147
      %p151 = pneg %p145
      %p152 = scmp.eq.s32.totalorder %s17, 3
      %p153 = por %p151, %p152
      %p154 = scmp.ne.s32.totalorder %s146, %s149
      %p155 = scmp.eq.s32.totalorder %s17, 0
      %p156 = por %p154, %p155
      %p157 = scmp.ne.s32.totalorder %s146, %s149
      %p158 = scmp.eq.s32.totalorder %s22, 3
      %p159 = por %p157, %p158
      %p160 = scmp.ne.s32.totalorder %s149, %s150
      %p161 = scmp.eq.s32.totalorder %s22, 0
      %p162 = por %p160, %p161
      %p163 = scmp.ne.s32.totalorder %s149, %s150
      %p164 = scmp.eq.s32.totalorder %s23, 3
      %p165 = por %p163, %p164
      %p167 = scmp.ne.s32.totalorder %s150, %s166
      %p168 = scmp.eq.s32.totalorder %s23, 0
      %p169 = por %p167, %p168
      %p170 = scmp.le.s32.totalorder 1, %s17
      %p171 = scmp.lt.s32.totalorder %s17, 5
      %p172 = pnand %p170, %p171
      %p173 = pneg %p172
      // Predicated region
      $region9: #{tpu_custom_call.1} parent=5 // pred_check
        _
      $region10: #{tpu_custom_call.1} parent=5 // pred_check_branch
        %175 = sbr.rel (%p172) target = $region12
      $region11: #{tpu_custom_call.1} parent=5 // pred_region
        %s176 = ssub.s32 %s17, 1
        // Predicated region
        $region13: #{tpu_custom_call.1} parent=11 // pred_check
          %p177 = pneg %p85
        $region14: #{tpu_custom_call.1} parent=11 // pred_check_branch
          %179 = sbr.rel (%p177) target = $region16
        $region15: #{tpu_custom_call.1} parent=11 // pred_region
          %s181 = ssub.s32 32, 32
          %182 = vsyncadd [#allocation6], %s181
          %s184 = sshll.u32 [#allocation5], 4
          %s185 = int_to_ptr.vmem [resolvable:$true] %s184
          %187 = dma.hbm_to_vmem [thread:$0]  %s1, 32, %s185, [#allocation6]
        $region16: #{tpu_custom_call.1} parent=11 // pred_fallthru
          _
        // Predicated region
        $region17: #{tpu_custom_call.1} parent=11 // pred_check
          %p188 = pneg %p106
        $region18: #{tpu_custom_call.1} parent=11 // pred_check_branch
          %190 = sbr.rel (%p188) target = $region20
        $region19: #{tpu_custom_call.1} parent=11 // pred_region
          _
        $region20: #{tpu_custom_call.1} parent=11 // pred_fallthru
          _
        // Predicated region
        $region21: #{tpu_custom_call.1} parent=11 // pred_check
          %p191 = pneg %p132
        $region22: #{tpu_custom_call.1} parent=11 // pred_check_branch
          %193 = sbr.rel (%p191) target = $region24
        $region23: #{tpu_custom_call.1} parent=11 // pred_region
          %s194 = smul.u32 6, %s29
          %s196 = ssub.s32 12288, 12288
          %197 = vsyncadd [#allocation6], %s196
          %s198 = smul.addr %s194, 64
          %s199 = scalar_lea.hbm %s3, %s198
          %s200 = sshll.u32 [#allocation7], 4
          %s201 = int_to_ptr.vmem [resolvable:$true] %s200
          %206 = dma.hbm_to_vmem [thread:$0]  %s199, 12288, %s201, [#allocation6], 384, 384, 24
        $region24: #{tpu_custom_call.1} parent=11 // pred_fallthru
          _
      $region12: #{tpu_custom_call.1} parent=5 // pred_fallthru
        _
      %p207 = scmp.lt.s32.totalorder %s17, 4
      // Predicated region
      $region25: #{tpu_custom_call.1} parent=5 // pred_check
        %p208 = pneg %p207
      $region26: #{tpu_custom_call.1} parent=5 // pred_check_branch
        %210 = sbr.rel (%p208) target = $region28
      $region27: #{tpu_custom_call.1} parent=5 // pred_region
        // Predicated region
        $region29: #{tpu_custom_call.1} parent=27 // pred_check
          %p211 = pneg %p58
        $region30: #{tpu_custom_call.1} parent=27 // pred_check_branch
          %213 = sbr.rel (%p211) target = $region32
        $region31: #{tpu_custom_call.1} parent=27 // pred_region
          %s214 = sand.u32 %s48, 1
          %s215 = scalar_lea.sflag [#allocation3], %s214
          %s216 = sand.u32 %s48, 1
          %s217 = smul.addr %s216, 256
          %s218 = scalar_lea.vmem [#allocation2], %s217
          %s219 = smul.u32 16, %s25
          %s221 = ssub.s32 4096, 4096
          %222 = vsyncadd %s215, %s221
          %s223 = smul.addr %s219, 2
          %s224 = smul.addr %s24, 64
          %s225 = sadd.s32 %s223, %s224
          %s226 = smul.addr %s225, 128
          %s227 = scalar_lea.hbm %s0, %s226
          %s228 = sshll.u32 %s218, 4
          %s229 = int_to_ptr.vmem [resolvable:$true] %s228
          %234 = dma.hbm_to_vmem [thread:$0]  %s227, 4096, %s229, %s215, 256, 256, 16
        $region32: #{tpu_custom_call.1} parent=27 // pred_fallthru
          _
      $region28: #{tpu_custom_call.1} parent=5 // pred_fallthru
        _
      %p235 = scmp.le.s32.totalorder 1, %s17
      %p236 = scmp.lt.s32.totalorder %s17, 5
      %p237 = pnand %p235, %p236
      %p238 = pneg %p237
      // Predicated region
      $region33: #{tpu_custom_call.1} parent=5 // pred_check
        _
      $region34: #{tpu_custom_call.1} parent=5 // pred_check_branch
        %240 = sbr.rel (%p237) target = $region36
      $region35: #{tpu_custom_call.1} parent=5 // pred_region
        %s241 = ssub.s32 %s17, 1
        %s242 = sand.u32 %s51, 1
        %s243 = scalar_lea.sflag [#allocation3], %s242
        %s244 = sand.u32 %s51, 1
        %s245 = smul.addr %s244, 256
        %s246 = scalar_lea.vmem [#allocation2], %s245
        // Predicated region
        $region37: #{tpu_custom_call.1} parent=35 // pred_check
          %p247 = pneg %p64
        $region38: #{tpu_custom_call.1} parent=35 // pred_check_branch
          %249 = sbr.rel (%p247) target = $region40
        $region39: #{tpu_custom_call.1} parent=35 // pred_region
          %250 = dma.done %s243, 4096
        $region40: #{tpu_custom_call.1} parent=35 // pred_fallthru
          _
        // Predicated region
        $region41: #{tpu_custom_call.1} parent=35 // pred_check
          %p251 = pneg %p85
        $region42: #{tpu_custom_call.1} parent=35 // pred_check_branch
          %253 = sbr.rel (%p251) target = $region44
        $region43: #{tpu_custom_call.1} parent=35 // pred_region
          %254 = dma.done [#allocation6], 32
        $region44: #{tpu_custom_call.1} parent=35 // pred_fallthru
          _
        // Predicated region
        $region45: #{tpu_custom_call.1} parent=35 // pred_check
          %p255 = pneg %p132
        $region46: #{tpu_custom_call.1} parent=35 // pred_check_branch
          %257 = sbr.rel (%p255) target = $region48
        $region47: #{tpu_custom_call.1} parent=35 // pred_region
          %258 = dma.done [#allocation6], 12288
        $region48: #{tpu_custom_call.1} parent=35 // pred_fallthru
          _
        %s259 = sand.u32 %s51, 1
        %s260 = scalar_lea.sflag [#allocation3], %s259
        %s261 = sand.u32 %s51, 1
        %s262 = smul.addr %s261, 256
        %s263 = scalar_lea.vmem [#allocation2], %s262
        %p264 = pneg %p64
        %p265 = pneg %p61
        %p266 = pneg %p85
        %p267 = pneg %p82
        %p268 = pneg %p106
        %p269 = pneg %p103
        %p270 = pneg %p132
        %p271 = pneg %p129
        %p272 = pneg %p162
        %p273 = pneg %p159
        %s274 = sand.u32 %s149, 1
        %s275 = scalar_lea.sflag [#allocation4], %s274
        %s276 = sand.u32 %s149, 1
        %s277 = smul.addr %s276, 384
        %s278 = scalar_lea.vmem [#allocation8], %s277
        %s279 = smul.u32 16, %s28
        %s280 = smul.u32 6, %s29
        %s281 = smul.u32 16, %s28
        %s282 = smul.u32 6, %s29
        %v283 = vld [vmem:[%s246] sm:$0xff]
        %v284 = vld [vmem:[%s246 + $0x8] sm:$0xff]
        %v285 = vld [vmem:[%s246 + $0x10] sm:$0xff]
        %v286 = vld [vmem:[%s246 + $0x18] sm:$0xff]
        %v287 = vld [vmem:[%s246 + $0x20] sm:$0xff]
        %v288 = vld [vmem:[%s246 + $0x28] sm:$0xff]
        %v289 = vld [vmem:[%s246 + $0x30] sm:$0xff]
        %v290 = vld [vmem:[%s246 + $0x38] sm:$0xff]
        %v291 = vld [vmem:[%s246 + $0x40] sm:$0xff]
        %v292 = vld [vmem:[%s246 + $0x48] sm:$0xff]
        %v293 = vld [vmem:[%s246 + $0x50] sm:$0xff]
        %v294 = vld [vmem:[%s246 + $0x58] sm:$0xff]
        %v295 = vld [vmem:[%s246 + $0x60] sm:$0xff]
        %v296 = vld [vmem:[%s246 + $0x68] sm:$0xff]
        %v297 = vld [vmem:[%s246 + $0x70] sm:$0xff]
        %v298 = vld [vmem:[%s246 + $0x78] sm:$0xff]
        %v299 = vld [vmem:[%s246 + $0x80] sm:$0xff]
        %v300 = vld [vmem:[%s246 + $0x88] sm:$0xff]
        %v301 = vld [vmem:[%s246 + $0x90] sm:$0xff]
        %v302 = vld [vmem:[%s246 + $0x98] sm:$0xff]
        %v303 = vld [vmem:[%s246 + $0xa0] sm:$0xff]
        %v304 = vld [vmem:[%s246 + $0xa8] sm:$0xff]
        %v305 = vld [vmem:[%s246 + $0xb0] sm:$0xff]
        %v306 = vld [vmem:[%s246 + $0xb8] sm:$0xff]
        %v307 = vld [vmem:[%s246 + $0xc0] sm:$0xff]
        %v308 = vld [vmem:[%s246 + $0xc8] sm:$0xff]
        %v309 = vld [vmem:[%s246 + $0xd0] sm:$0xff]
        %v310 = vld [vmem:[%s246 + $0xd8] sm:$0xff]
        %v311 = vld [vmem:[%s246 + $0xe0] sm:$0xff]
        %v312 = vld [vmem:[%s246 + $0xe8] sm:$0xff]
        %v313 = vld [vmem:[%s246 + $0xf0] sm:$0xff]
        %v314 = vld [vmem:[%s246 + $0xf8] sm:$0xff]
        %v315 = vld [vmem:[#allocation5] sm:$0x3]
        %v316 = vld [vmem:[%s2] sm:$0x3]
        %v317 = vadd.f32 %v283, %v284
        %318 = vadd.xlane.f32.xlu0 %v317
        %v319 = vpop.xlane.xlu0 %318
        %v320 = vadd.f32 %v285, %v286
        %321 = vadd.xlane.f32.xlu0 %v320
        %v322 = vpop.xlane.xlu0 %321
        %v323 = vadd.f32 %v287, %v288
        %324 = vadd.xlane.f32.xlu0 %v323
        %v325 = vpop.xlane.xlu0 %324
        %v326 = vadd.f32 %v289, %v290
        %327 = vadd.xlane.f32.xlu0 %v326
        %v328 = vpop.xlane.xlu0 %327
        %v329 = vadd.f32 %v291, %v292
        %330 = vadd.xlane.f32.xlu0 %v329
        %v331 = vpop.xlane.xlu0 %330
        %v332 = vadd.f32 %v293, %v294
        %333 = vadd.xlane.f32.xlu0 %v332
        %v334 = vpop.xlane.xlu0 %333
        %v335 = vadd.f32 %v295, %v296
        %336 = vadd.xlane.f32.xlu0 %v335
        %v337 = vpop.xlane.xlu0 %336
        %v338 = vadd.f32 %v297, %v298
        %339 = vadd.xlane.f32.xlu0 %v338
        %v340 = vpop.xlane.xlu0 %339
        %v341 = vadd.f32 %v299, %v300
        %342 = vadd.xlane.f32.xlu0 %v341
        %v343 = vpop.xlane.xlu0 %342
        %v344 = vadd.f32 %v301, %v302
        %345 = vadd.xlane.f32.xlu0 %v344
        %v346 = vpop.xlane.xlu0 %345
        %v347 = vadd.f32 %v303, %v304
        %348 = vadd.xlane.f32.xlu0 %v347
        %v349 = vpop.xlane.xlu0 %348
        %v350 = vadd.f32 %v305, %v306
        %351 = vadd.xlane.f32.xlu0 %v350
        %v352 = vpop.xlane.xlu0 %351
        %v353 = vadd.f32 %v307, %v308
        %354 = vadd.xlane.f32.xlu0 %v353
        %v355 = vpop.xlane.xlu0 %354
        %v356 = vadd.f32 %v309, %v310
        %357 = vadd.xlane.f32.xlu0 %v356
        %v358 = vpop.xlane.xlu0 %357
        %v359 = vadd.f32 %v311, %v312
        %360 = vadd.xlane.f32.xlu0 %v359
        %v361 = vpop.xlane.xlu0 %360
        %v362 = vadd.f32 %v313, %v314
        %363 = vadd.xlane.f32.xlu0 %v362
        %v364 = vpop.xlane.xlu0 %363
        %v365 = vrcp.pop 256.0
        %v366 = vmul.f32 %v319, %v365
        %v367 = vmul.f32 %v322, %v365
        %v368 = vmul.f32 %v325, %v365
        %v369 = vmul.f32 %v328, %v365
        %v370 = vmul.f32 %v331, %v365
        %v371 = vmul.f32 %v334, %v365
        %v372 = vmul.f32 %v337, %v365
        %v373 = vmul.f32 %v340, %v365
        %v374 = vmul.f32 %v343, %v365
        %v375 = vmul.f32 %v346, %v365
        %v376 = vmul.f32 %v349, %v365
        %v377 = vmul.f32 %v352, %v365
        %v378 = vmul.f32 %v355, %v365
        %v379 = vmul.f32 %v358, %v365
        %v380 = vmul.f32 %v361, %v365
        %v381 = vmul.f32 %v364, %v365
        %v382 = vsub.f32 %v283, %v366
        %v383 = vsub.f32 %v284, %v366
        %v384 = vsub.f32 %v285, %v367
        %v385 = vsub.f32 %v286, %v367
        %v386 = vsub.f32 %v287, %v368
        %v387 = vsub.f32 %v288, %v368
        %v388 = vsub.f32 %v289, %v369
        %v389 = vsub.f32 %v290, %v369
        %v390 = vsub.f32 %v291, %v370
        %v391 = vsub.f32 %v292, %v370
        %v392 = vsub.f32 %v293, %v371
        %v393 = vsub.f32 %v294, %v371
        %v394 = vsub.f32 %v295, %v372
        %v395 = vsub.f32 %v296, %v372
        %v396 = vsub.f32 %v297, %v373
        %v397 = vsub.f32 %v298, %v373
        %v398 = vsub.f32 %v299, %v374
        %v399 = vsub.f32 %v300, %v374
        %v400 = vsub.f32 %v301, %v375
        %v401 = vsub.f32 %v302, %v375
        %v402 = vsub.f32 %v303, %v376
        %v403 = vsub.f32 %v304, %v376
        %v404 = vsub.f32 %v305, %v377
        %v405 = vsub.f32 %v306, %v377
        %v406 = vsub.f32 %v307, %v378
        %v407 = vsub.f32 %v308, %v378
        %v408 = vsub.f32 %v309, %v379
        %v409 = vsub.f32 %v310, %v379
        %v410 = vsub.f32 %v311, %v380
        %v411 = vsub.f32 %v312, %v380
        %v412 = vsub.f32 %v313, %v381
        %v413 = vsub.f32 %v314, %v381
        %v414 = vmul.f32 %v382, %v382
        %v415 = vmul.f32 %v383, %v383
        %v416 = vmul.f32 %v384, %v384
        %v417 = vmul.f32 %v385, %v385
        %v418 = vmul.f32 %v386, %v386
        %v419 = vmul.f32 %v387, %v387
        %v420 = vmul.f32 %v388, %v388
        %v421 = vmul.f32 %v389, %v389
        %v422 = vmul.f32 %v390, %v390
        %v423 = vmul.f32 %v391, %v391
        %v424 = vmul.f32 %v392, %v392
        %v425 = vmul.f32 %v393, %v393
        %v426 = vmul.f32 %v394, %v394
        %v427 = vmul.f32 %v395, %v395
        %v428 = vmul.f32 %v396, %v396
        %v429 = vmul.f32 %v397, %v397
        %v430 = vmul.f32 %v398, %v398
        %v431 = vmul.f32 %v399, %v399
        %v432 = vmul.f32 %v400, %v400
        %v433 = vmul.f32 %v401, %v401
        %v434 = vmul.f32 %v402, %v402
        %v435 = vmul.f32 %v403, %v403
        %v436 = vmul.f32 %v404, %v404
        %v437 = vmul.f32 %v405, %v405
        %v438 = vmul.f32 %v406, %v406
        %v439 = vmul.f32 %v407, %v407
        %v440 = vmul.f32 %v408, %v408
        %v441 = vmul.f32 %v409, %v409
        %v442 = vmul.f32 %v410, %v410
        %v443 = vmul.f32 %v411, %v411
        %v444 = vmul.f32 %v412, %v412
        %v445 = vmul.f32 %v413, %v413
        %v446 = vadd.f32 %v414, %v415
        %447 = vadd.xlane.f32.xlu0 %v446
        %v448 = vpop.xlane.xlu0 %447
        %v449 = vadd.f32 %v416, %v417
        %450 = vadd.xlane.f32.xlu0 %v449
        %v451 = vpop.xlane.xlu0 %450
        %v452 = vadd.f32 %v418, %v419
        %453 = vadd.xlane.f32.xlu0 %v452
        %v454 = vpop.xlane.xlu0 %453
        %v455 = vadd.f32 %v420, %v421
        %456 = vadd.xlane.f32.xlu0 %v455
        %v457 = vpop.xlane.xlu0 %456
        %v458 = vadd.f32 %v422, %v423
        %459 = vadd.xlane.f32.xlu0 %v458
        %v460 = vpop.xlane.xlu0 %459
        %v461 = vadd.f32 %v424, %v425
        %462 = vadd.xlane.f32.xlu0 %v461
        %v463 = vpop.xlane.xlu0 %462
        %v464 = vadd.f32 %v426, %v427
        %465 = vadd.xlane.f32.xlu0 %v464
        %v466 = vpop.xlane.xlu0 %465
        %v467 = vadd.f32 %v428, %v429
        %468 = vadd.xlane.f32.xlu0 %v467
        %v469 = vpop.xlane.xlu0 %468
        %v470 = vadd.f32 %v430, %v431
        %471 = vadd.xlane.f32.xlu0 %v470
        %v472 = vpop.xlane.xlu0 %471
        %v473 = vadd.f32 %v432, %v433
        %474 = vadd.xlane.f32.xlu0 %v473
        %v475 = vpop.xlane.xlu0 %474
        %v476 = vadd.f32 %v434, %v435
        %477 = vadd.xlane.f32.xlu0 %v476
        %v478 = vpop.xlane.xlu0 %477
        %v479 = vadd.f32 %v436, %v437
        %480 = vadd.xlane.f32.xlu0 %v479
        %v481 = vpop.xlane.xlu0 %480
        %v482 = vadd.f32 %v438, %v439
        %483 = vadd.xlane.f32.xlu0 %v482
        %v484 = vpop.xlane.xlu0 %483
        %v485 = vadd.f32 %v440, %v441
        %486 = vadd.xlane.f32.xlu0 %v485
        %v487 = vpop.xlane.xlu0 %486
        %v488 = vadd.f32 %v442, %v443
        %489 = vadd.xlane.f32.xlu0 %v488
        %v490 = vpop.xlane.xlu0 %489
        %v491 = vadd.f32 %v444, %v445
        %492 = vadd.xlane.f32.xlu0 %v491
        %v493 = vpop.xlane.xlu0 %492
        %v494 = vmul.f32 %v448, %v365
        %v495 = vmul.f32 %v451, %v365
        %v496 = vmul.f32 %v454, %v365
        %v497 = vmul.f32 %v457, %v365
        %v498 = vmul.f32 %v460, %v365
        %v499 = vmul.f32 %v463, %v365
        %v500 = vmul.f32 %v466, %v365
        %v501 = vmul.f32 %v469, %v365
        %v502 = vmul.f32 %v472, %v365
        %v503 = vmul.f32 %v475, %v365
        %v504 = vmul.f32 %v478, %v365
        %v505 = vmul.f32 %v481, %v365
        %v506 = vmul.f32 %v484, %v365
        %v507 = vmul.f32 %v487, %v365
        %v508 = vmul.f32 %v490, %v365
        %v509 = vmul.f32 %v493, %v365
        %v510 = vadd.f32 %v494, 1e-05
        %v511 = vadd.f32 %v495, 1e-05
        %v512 = vadd.f32 %v496, 1e-05
        %v513 = vadd.f32 %v497, 1e-05
        %v514 = vadd.f32 %v498, 1e-05
        %v515 = vadd.f32 %v499, 1e-05
        %v516 = vadd.f32 %v500, 1e-05
        %v517 = vadd.f32 %v501, 1e-05
        %v518 = vadd.f32 %v502, 1e-05
        %v519 = vadd.f32 %v503, 1e-05
        %v520 = vadd.f32 %v504, 1e-05
        %v521 = vadd.f32 %v505, 1e-05
        %v522 = vadd.f32 %v506, 1e-05
        %v523 = vadd.f32 %v507, 1e-05
        %v524 = vadd.f32 %v508, 1e-05
        %v525 = vadd.f32 %v509, 1e-05
        %v526 = vrsqrt.pop %v510
        %v527 = vrsqrt.pop %v511
        %v528 = vrsqrt.pop %v512
        %v529 = vrsqrt.pop %v513
        %v530 = vrsqrt.pop %v514
        %v531 = vrsqrt.pop %v515
        %v532 = vrsqrt.pop %v516
        %v533 = vrsqrt.pop %v517
        %v534 = vrsqrt.pop %v518
        %v535 = vrsqrt.pop %v519
        %v536 = vrsqrt.pop %v520
        %v537 = vrsqrt.pop %v521
        %v538 = vrsqrt.pop %v522
        %v539 = vrsqrt.pop %v523
        %v540 = vrsqrt.pop %v524
        %v541 = vrsqrt.pop %v525
        %v542 = vmul.f32 %v382, %v526
        %v543 = vmul.f32 %v383, %v526
        %v544 = vmul.f32 %v384, %v527
        %v545 = vmul.f32 %v385, %v527
        %v546 = vmul.f32 %v386, %v528
        %v547 = vmul.f32 %v387, %v528
        %v548 = vmul.f32 %v388, %v529
        %v549 = vmul.f32 %v389, %v529
        %v550 = vmul.f32 %v390, %v530
        %v551 = vmul.f32 %v391, %v530
        %v552 = vmul.f32 %v392, %v531
        %v553 = vmul.f32 %v393, %v531
        %v554 = vmul.f32 %v394, %v532
        %v555 = vmul.f32 %v395, %v532
        %v556 = vmul.f32 %v396, %v533
        %v557 = vmul.f32 %v397, %v533
        %v558 = vmul.f32 %v398, %v534
        %v559 = vmul.f32 %v399, %v534
        %v560 = vmul.f32 %v400, %v535
        %v561 = vmul.f32 %v401, %v535
        %v562 = vmul.f32 %v402, %v536
        %v563 = vmul.f32 %v403, %v536
        %v564 = vmul.f32 %v404, %v537
        %v565 = vmul.f32 %v405, %v537
        %v566 = vmul.f32 %v406, %v538
        %v567 = vmul.f32 %v407, %v538
        %v568 = vmul.f32 %v408, %v539
        %v569 = vmul.f32 %v409, %v539
        %v570 = vmul.f32 %v410, %v540
        %v571 = vmul.f32 %v411, %v540
        %v572 = vmul.f32 %v412, %v541
        %v573 = vmul.f32 %v413, %v541
        %v575 = vlaneseq
        %v576 = vshrl.u32 %v575, 7
        %v577 = vsub.s32 0, %v576
        %v578 = vrot.slane %v315, %v577
        %v579 = vlaneseq
        %v580 = vshrl.u32 %v579, 7
        %v581 = vsub.s32 1, %v580
        %v582 = vrot.slane %v315, %v581
        %v585 = vmul.f32 %v542, %v578
        %v586 = vmul.f32 %v543, %v582
        %v587 = vmul.f32 %v544, %v578
        %v588 = vmul.f32 %v545, %v582
        %v589 = vmul.f32 %v546, %v578
        %v590 = vmul.f32 %v547, %v582
        %v591 = vmul.f32 %v548, %v578
        %v592 = vmul.f32 %v549, %v582
        %v593 = vmul.f32 %v550, %v578
        %v594 = vmul.f32 %v551, %v582
        %v595 = vmul.f32 %v552, %v578
        %v596 = vmul.f32 %v553, %v582
        %v597 = vmul.f32 %v554, %v578
        %v598 = vmul.f32 %v555, %v582
        %v599 = vmul.f32 %v556, %v578
        %v600 = vmul.f32 %v557, %v582
        %v601 = vmul.f32 %v558, %v578
        %v602 = vmul.f32 %v559, %v582
        %v603 = vmul.f32 %v560, %v578
        %v604 = vmul.f32 %v561, %v582
        %v605 = vmul.f32 %v562, %v578
        %v606 = vmul.f32 %v563, %v582
        %v607 = vmul.f32 %v564, %v578
        %v608 = vmul.f32 %v565, %v582
        %v609 = vmul.f32 %v566, %v578
        %v610 = vmul.f32 %v567, %v582
        %v611 = vmul.f32 %v568, %v578
        %v612 = vmul.f32 %v569, %v582
        %v613 = vmul.f32 %v570, %v578
        %v614 = vmul.f32 %v571, %v582
        %v615 = vmul.f32 %v572, %v578
        %v616 = vmul.f32 %v573, %v582
        %v618 = vlaneseq
        %v619 = vshrl.u32 %v618, 7
        %v620 = vsub.s32 0, %v619
        %v621 = vrot.slane %v316, %v620
        %v622 = vlaneseq
        %v623 = vshrl.u32 %v622, 7
        %v624 = vsub.s32 1, %v623
        %v625 = vrot.slane %v316, %v624
        %v628 = vadd.f32 %v585, %v621
        %v629 = vadd.f32 %v586, %v625
        %v630 = vadd.f32 %v587, %v621
        %v631 = vadd.f32 %v588, %v625
        %v632 = vadd.f32 %v589, %v621
        %v633 = vadd.f32 %v590, %v625
        %v634 = vadd.f32 %v591, %v621
        %v635 = vadd.f32 %v592, %v625
        %v636 = vadd.f32 %v593, %v621
        %v637 = vadd.f32 %v594, %v625
        %v638 = vadd.f32 %v595, %v621
        %v639 = vadd.f32 %v596, %v625
        %v640 = vadd.f32 %v597, %v621
        %v641 = vadd.f32 %v598, %v625
        %v642 = vadd.f32 %v599, %v621
        %v643 = vadd.f32 %v600, %v625
        %v644 = vadd.f32 %v601, %v621
        %v645 = vadd.f32 %v602, %v625
        %v646 = vadd.f32 %v603, %v621
        %v647 = vadd.f32 %v604, %v625
        %v648 = vadd.f32 %v605, %v621
        %v649 = vadd.f32 %v606, %v625
        %v650 = vadd.f32 %v607, %v621
        %v651 = vadd.f32 %v608, %v625
        %v652 = vadd.f32 %v609, %v621
        %v653 = vadd.f32 %v610, %v625
        %v654 = vadd.f32 %v611, %v621
        %v655 = vadd.f32 %v612, %v625
        %v656 = vadd.f32 %v613, %v621
        %v657 = vadd.f32 %v614, %v625
        %v658 = vadd.f32 %v615, %v621
        %v659 = vadd.f32 %v616, %v625
        %v660 = vpack.c.bf16 %v630, %v628
        %v661 = vpack.c.bf16 %v631, %v629
        %v662 = vpack.c.bf16 %v634, %v632
        %v663 = vpack.c.bf16 %v635, %v633
        %v664 = vpack.c.bf16 %v638, %v636
        %v665 = vpack.c.bf16 %v639, %v637
        %v666 = vpack.c.bf16 %v642, %v640
        %v667 = vpack.c.bf16 %v643, %v641
        %v668 = vpack.c.bf16 %v646, %v644
        %v669 = vpack.c.bf16 %v647, %v645
        %v670 = vpack.c.bf16 %v650, %v648
        %v671 = vpack.c.bf16 %v651, %v649
        %v672 = vpack.c.bf16 %v654, %v652
        %v673 = vpack.c.bf16 %v655, %v653
        %v674 = vpack.c.bf16 %v658, %v656
        %v675 = vpack.c.bf16 %v659, %v657
        %v676 = vld [vmem:[#allocation7] sm:$0xff]
        %v677 = vld [vmem:[#allocation7 + $0x8] sm:$0xff]
        %v678 = vld [vmem:[#allocation7 + $0x10] sm:$0xff]
        %v679 = vld [vmem:[#allocation7 + $0x18] sm:$0xff]
        %v680 = vld [vmem:[#allocation7 + $0x20] sm:$0xff]
        %v681 = vld [vmem:[#allocation7 + $0x28] sm:$0xff]
        %v682 = vld [vmem:[#allocation7 + $0x30] sm:$0xff]
        %v683 = vld [vmem:[#allocation7 + $0x38] sm:$0xff]
        %v684 = vld [vmem:[#allocation7 + $0x40] sm:$0xff]
        %v685 = vld [vmem:[#allocation7 + $0x48] sm:$0xff]
        %v686 = vld [vmem:[#allocation7 + $0x50] sm:$0xff]
        %v687 = vld [vmem:[#allocation7 + $0x58] sm:$0xff]
        %v688 = vld [vmem:[#allocation7 + $0x60] sm:$0xff]
        %v689 = vld [vmem:[#allocation7 + $0x68] sm:$0xff]
        %v690 = vld [vmem:[#allocation7 + $0x70] sm:$0xff]
        %v691 = vld [vmem:[#allocation7 + $0x78] sm:$0xff]
        %v692 = vld [vmem:[#allocation7 + $0x80] sm:$0xff]
        %v693 = vld [vmem:[#allocation7 + $0x88] sm:$0xff]
        %v694 = vld [vmem:[#allocation7 + $0x90] sm:$0xff]
        %v695 = vld [vmem:[#allocation7 + $0x98] sm:$0xff]
        %v696 = vld [vmem:[#allocation7 + $0xa0] sm:$0xff]
        %v697 = vld [vmem:[#allocation7 + $0xa8] sm:$0xff]
        %v698 = vld [vmem:[#allocation7 + $0xb0] sm:$0xff]
        %v699 = vld [vmem:[#allocation7 + $0xb8] sm:$0xff]
        %v700 = vld [vmem:[#allocation7 + $0xc0] sm:$0xff]
        %v701 = vld [vmem:[#allocation7 + $0xc8] sm:$0xff]
        %v702 = vld [vmem:[#allocation7 + $0xd0] sm:$0xff]
        %v703 = vld [vmem:[#allocation7 + $0xd8] sm:$0xff]
        %v704 = vld [vmem:[#allocation7 + $0xe0] sm:$0xff]
        %v705 = vld [vmem:[#allocation7 + $0xe8] sm:$0xff]
        %v706 = vld [vmem:[#allocation7 + $0xf0] sm:$0xff]
        %v707 = vld [vmem:[#allocation7 + $0xf8] sm:$0xff]
        %v708 = vld [vmem:[#allocation7 + $0x100] sm:$0xff]
        %v709 = vld [vmem:[#allocation7 + $0x108] sm:$0xff]
        %v710 = vld [vmem:[#allocation7 + $0x110] sm:$0xff]
        %v711 = vld [vmem:[#allocation7 + $0x118] sm:$0xff]
        %v712 = vld [vmem:[#allocation7 + $0x120] sm:$0xff]
        %v713 = vld [vmem:[#allocation7 + $0x128] sm:$0xff]
        %v714 = vld [vmem:[#allocation7 + $0x130] sm:$0xff]
        %v715 = vld [vmem:[#allocation7 + $0x138] sm:$0xff]
        %v716 = vld [vmem:[#allocation7 + $0x140] sm:$0xff]
        %v717 = vld [vmem:[#allocation7 + $0x148] sm:$0xff]
        %v718 = vld [vmem:[#allocation7 + $0x150] sm:$0xff]
        %v719 = vld [vmem:[#allocation7 + $0x158] sm:$0xff]
        %v720 = vld [vmem:[#allocation7 + $0x160] sm:$0xff]
        %v721 = vld [vmem:[#allocation7 + $0x168] sm:$0xff]
        %v722 = vld [vmem:[#allocation7 + $0x170] sm:$0xff]
        %v723 = vld [vmem:[#allocation7 + $0x178] sm:$0xff]
        %v724 = vld [vmem:[#allocation7 + $0x180] sm:$0xff]
        %v725 = vld [vmem:[#allocation7 + $0x188] sm:$0xff]
        %v726 = vld [vmem:[#allocation7 + $0x190] sm:$0xff]
        %v727 = vld [vmem:[#allocation7 + $0x198] sm:$0xff]
        %v728 = vld [vmem:[#allocation7 + $0x1a0] sm:$0xff]
        %v729 = vld [vmem:[#allocation7 + $0x1a8] sm:$0xff]
        %v730 = vld [vmem:[#allocation7 + $0x1b0] sm:$0xff]
        %v731 = vld [vmem:[#allocation7 + $0x1b8] sm:$0xff]
        %v732 = vld [vmem:[#allocation7 + $0x1c0] sm:$0xff]
        %v733 = vld [vmem:[#allocation7 + $0x1c8] sm:$0xff]
        %v734 = vld [vmem:[#allocation7 + $0x1d0] sm:$0xff]
        %v735 = vld [vmem:[#allocation7 + $0x1d8] sm:$0xff]
        %v736 = vld [vmem:[#allocation7 + $0x1e0] sm:$0xff]
        %v737 = vld [vmem:[#allocation7 + $0x1e8] sm:$0xff]
        %v738 = vld [vmem:[#allocation7 + $0x1f0] sm:$0xff]
        %v739 = vld [vmem:[#allocation7 + $0x1f8] sm:$0xff]
        %v740 = vld [vmem:[#allocation7 + $0x200] sm:$0xff]
        %v741 = vld [vmem:[#allocation7 + $0x208] sm:$0xff]
        %v742 = vld [vmem:[#allocation7 + $0x210] sm:$0xff]
        %v743 = vld [vmem:[#allocation7 + $0x218] sm:$0xff]
        %v744 = vld [vmem:[#allocation7 + $0x220] sm:$0xff]
        %v745 = vld [vmem:[#allocation7 + $0x228] sm:$0xff]
        %v746 = vld [vmem:[#allocation7 + $0x230] sm:$0xff]
        %v747 = vld [vmem:[#allocation7 + $0x238] sm:$0xff]
        %v748 = vld [vmem:[#allocation7 + $0x240] sm:$0xff]
        %v749 = vld [vmem:[#allocation7 + $0x248] sm:$0xff]
        %v750 = vld [vmem:[#allocation7 + $0x250] sm:$0xff]
        %v751 = vld [vmem:[#allocation7 + $0x258] sm:$0xff]
        %v752 = vld [vmem:[#allocation7 + $0x260] sm:$0xff]
        %v753 = vld [vmem:[#allocation7 + $0x268] sm:$0xff]
        %v754 = vld [vmem:[#allocation7 + $0x270] sm:$0xff]
        %v755 = vld [vmem:[#allocation7 + $0x278] sm:$0xff]
        %v756 = vld [vmem:[#allocation7 + $0x280] sm:$0xff]
        %v757 = vld [vmem:[#allocation7 + $0x288] sm:$0xff]
        %v758 = vld [vmem:[#allocation7 + $0x290] sm:$0xff]
        %v759 = vld [vmem:[#allocation7 + $0x298] sm:$0xff]
        %v760 = vld [vmem:[#allocation7 + $0x2a0] sm:$0xff]
        %v761 = vld [vmem:[#allocation7 + $0x2a8] sm:$0xff]
        %v762 = vld [vmem:[#allocation7 + $0x2b0] sm:$0xff]
        %v763 = vld [vmem:[#allocation7 + $0x2b8] sm:$0xff]
        %v764 = vld [vmem:[#allocation7 + $0x2c0] sm:$0xff]
        %v765 = vld [vmem:[#allocation7 + $0x2c8] sm:$0xff]
        %v766 = vld [vmem:[#allocation7 + $0x2d0] sm:$0xff]
        %v767 = vld [vmem:[#allocation7 + $0x2d8] sm:$0xff]
        %v768 = vld [vmem:[#allocation7 + $0x2e0] sm:$0xff]
        %v769 = vld [vmem:[#allocation7 + $0x2e8] sm:$0xff]
        %v770 = vld [vmem:[#allocation7 + $0x2f0] sm:$0xff]
        %v771 = vld [vmem:[#allocation7 + $0x2f8] sm:$0xff]
        %v868 = vunpack.c.l.b16 %v676
        %v869 = vunpack.c.h.b16 %v676
        %v870 = vunpack.c.l.b16 %v677
        %v871 = vunpack.c.h.b16 %v677
        %v872 = vunpack.c.l.b16 %v678
        %v873 = vunpack.c.h.b16 %v678
        %v874 = vunpack.c.l.b16 %v679
        %v875 = vunpack.c.h.b16 %v679
        %v876 = vunpack.c.l.b16 %v680
        %v877 = vunpack.c.h.b16 %v680
        %v878 = vunpack.c.l.b16 %v681
        %v879 = vunpack.c.h.b16 %v681
        %v880 = vunpack.c.l.b16 %v682
        %v881 = vunpack.c.h.b16 %v682
        %v882 = vunpack.c.l.b16 %v683
        %v883 = vunpack.c.h.b16 %v683
        %v884 = vunpack.c.l.b16 %v684
        %v885 = vunpack.c.h.b16 %v684
        %v886 = vunpack.c.l.b16 %v685
        %v887 = vunpack.c.h.b16 %v685
        %v888 = vunpack.c.l.b16 %v686
        %v889 = vunpack.c.h.b16 %v686
        %v890 = vunpack.c.l.b16 %v687
        %v891 = vunpack.c.h.b16 %v687
        %v892 = vunpack.c.l.b16 %v688
        %v893 = vunpack.c.h.b16 %v688
        %v894 = vunpack.c.l.b16 %v689
        %v895 = vunpack.c.h.b16 %v689
        %v896 = vunpack.c.l.b16 %v690
        %v897 = vunpack.c.h.b16 %v690
        %v898 = vunpack.c.l.b16 %v691
        %v899 = vunpack.c.h.b16 %v691
        %v900 = vunpack.c.l.b16 %v692
        %v901 = vunpack.c.h.b16 %v692
        %v902 = vunpack.c.l.b16 %v693
        %v903 = vunpack.c.h.b16 %v693
        %v904 = vunpack.c.l.b16 %v694
        %v905 = vunpack.c.h.b16 %v694
        %v906 = vunpack.c.l.b16 %v695
        %v907 = vunpack.c.h.b16 %v695
        %v908 = vunpack.c.l.b16 %v696
        %v909 = vunpack.c.h.b16 %v696
        %v910 = vunpack.c.l.b16 %v697
        %v911 = vunpack.c.h.b16 %v697
        %v912 = vunpack.c.l.b16 %v698
        %v913 = vunpack.c.h.b16 %v698
        %v914 = vunpack.c.l.b16 %v699
        %v915 = vunpack.c.h.b16 %v699
        %v916 = vunpack.c.l.b16 %v700
        %v917 = vunpack.c.h.b16 %v700
        %v918 = vunpack.c.l.b16 %v701
        %v919 = vunpack.c.h.b16 %v701
        %v920 = vunpack.c.l.b16 %v702
        %v921 = vunpack.c.h.b16 %v702
        %v922 = vunpack.c.l.b16 %v703
        %v923 = vunpack.c.h.b16 %v703
        %v924 = vunpack.c.l.b16 %v704
        %v925 = vunpack.c.h.b16 %v704
        %v926 = vunpack.c.l.b16 %v705
        %v927 = vunpack.c.h.b16 %v705
        %v928 = vunpack.c.l.b16 %v706
        %v929 = vunpack.c.h.b16 %v706
        %v930 = vunpack.c.l.b16 %v707
        %v931 = vunpack.c.h.b16 %v707
        %v932 = vunpack.c.l.b16 %v708
        %v933 = vunpack.c.h.b16 %v708
        %v934 = vunpack.c.l.b16 %v709
        %v935 = vunpack.c.h.b16 %v709
        %v936 = vunpack.c.l.b16 %v710
        %v937 = vunpack.c.h.b16 %v710
        %v938 = vunpack.c.l.b16 %v711
        %v939 = vunpack.c.h.b16 %v711
        %v940 = vunpack.c.l.b16 %v712
        %v941 = vunpack.c.h.b16 %v712
        %v942 = vunpack.c.l.b16 %v713
        %v943 = vunpack.c.h.b16 %v713
        %v944 = vunpack.c.l.b16 %v714
        %v945 = vunpack.c.h.b16 %v714
        %v946 = vunpack.c.l.b16 %v715
        %v947 = vunpack.c.h.b16 %v715
        %v948 = vunpack.c.l.b16 %v716
        %v949 = vunpack.c.h.b16 %v716
        %v950 = vunpack.c.l.b16 %v717
        %v951 = vunpack.c.h.b16 %v717
        %v952 = vunpack.c.l.b16 %v718
        %v953 = vunpack.c.h.b16 %v718
        %v954 = vunpack.c.l.b16 %v719
        %v955 = vunpack.c.h.b16 %v719
        %v956 = vunpack.c.l.b16 %v720
        %v957 = vunpack.c.h.b16 %v720
        %v958 = vunpack.c.l.b16 %v721
        %v959 = vunpack.c.h.b16 %v721
        %v960 = vunpack.c.l.b16 %v722
        %v961 = vunpack.c.h.b16 %v722
        %v962 = vunpack.c.l.b16 %v723
        %v963 = vunpack.c.h.b16 %v723
        %v964 = vunpack.c.l.b16 %v724
        %v965 = vunpack.c.h.b16 %v724
        %v966 = vunpack.c.l.b16 %v725
        %v967 = vunpack.c.h.b16 %v725
        %v968 = vunpack.c.l.b16 %v726
        %v969 = vunpack.c.h.b16 %v726
        %v970 = vunpack.c.l.b16 %v727
        %v971 = vunpack.c.h.b16 %v727
        %v972 = vunpack.c.l.b16 %v728
        %v973 = vunpack.c.h.b16 %v728
        %v974 = vunpack.c.l.b16 %v729
        %v975 = vunpack.c.h.b16 %v729
        %v976 = vunpack.c.l.b16 %v730
        %v977 = vunpack.c.h.b16 %v730
        %v978 = vunpack.c.l.b16 %v731
        %v979 = vunpack.c.h.b16 %v731
        %v980 = vunpack.c.l.b16 %v732
        %v981 = vunpack.c.h.b16 %v732
        %v982 = vunpack.c.l.b16 %v733
        %v983 = vunpack.c.h.b16 %v733
        %v984 = vunpack.c.l.b16 %v734
        %v985 = vunpack.c.h.b16 %v734
        %v986 = vunpack.c.l.b16 %v735
        %v987 = vunpack.c.h.b16 %v735
        %v988 = vunpack.c.l.b16 %v736
        %v989 = vunpack.c.h.b16 %v736
        %v990 = vunpack.c.l.b16 %v737
        %v991 = vunpack.c.h.b16 %v737
        %v992 = vunpack.c.l.b16 %v738
        %v993 = vunpack.c.h.b16 %v738
        %v994 = vunpack.c.l.b16 %v739
        %v995 = vunpack.c.h.b16 %v739
        %v996 = vunpack.c.l.b16 %v740
        %v997 = vunpack.c.h.b16 %v740
        %v998 = vunpack.c.l.b16 %v741
        %v999 = vunpack.c.h.b16 %v741
        %v1000 = vunpack.c.l.b16 %v742
        %v1001 = vunpack.c.h.b16 %v742
        %v1002 = vunpack.c.l.b16 %v743
        %v1003 = vunpack.c.h.b16 %v743
        %v1004 = vunpack.c.l.b16 %v744
        %v1005 = vunpack.c.h.b16 %v744
        %v1006 = vunpack.c.l.b16 %v745
        %v1007 = vunpack.c.h.b16 %v745
        %v1008 = vunpack.c.l.b16 %v746
        %v1009 = vunpack.c.h.b16 %v746
        %v1010 = vunpack.c.l.b16 %v747
        %v1011 = vunpack.c.h.b16 %v747
        %v1012 = vunpack.c.l.b16 %v748
        %v1013 = vunpack.c.h.b16 %v748
        %v1014 = vunpack.c.l.b16 %v749
        %v1015 = vunpack.c.h.b16 %v749
        %v1016 = vunpack.c.l.b16 %v750
        %v1017 = vunpack.c.h.b16 %v750
        %v1018 = vunpack.c.l.b16 %v751
        %v1019 = vunpack.c.h.b16 %v751
        %v1020 = vunpack.c.l.b16 %v752
        %v1021 = vunpack.c.h.b16 %v752
        %v1022 = vunpack.c.l.b16 %v753
        %v1023 = vunpack.c.h.b16 %v753
        %v1024 = vunpack.c.l.b16 %v754
        %v1025 = vunpack.c.h.b16 %v754
        %v1026 = vunpack.c.l.b16 %v755
        %v1027 = vunpack.c.h.b16 %v755
        %v1028 = vunpack.c.l.b16 %v756
        %v1029 = vunpack.c.h.b16 %v756
        %v1030 = vunpack.c.l.b16 %v757
        %v1031 = vunpack.c.h.b16 %v757
        %v1032 = vunpack.c.l.b16 %v758
        %v1033 = vunpack.c.h.b16 %v758
        %v1034 = vunpack.c.l.b16 %v759
        %v1035 = vunpack.c.h.b16 %v759
        %v1036 = vunpack.c.l.b16 %v760
        %v1037 = vunpack.c.h.b16 %v760
        %v1038 = vunpack.c.l.b16 %v761
        %v1039 = vunpack.c.h.b16 %v761
        %v1040 = vunpack.c.l.b16 %v762
        %v1041 = vunpack.c.h.b16 %v762
        %v1042 = vunpack.c.l.b16 %v763
        %v1043 = vunpack.c.h.b16 %v763
        %v1044 = vunpack.c.l.b16 %v764
        %v1045 = vunpack.c.h.b16 %v764
        %v1046 = vunpack.c.l.b16 %v765
        %v1047 = vunpack.c.h.b16 %v765
        %v1048 = vunpack.c.l.b16 %v766
        %v1049 = vunpack.c.h.b16 %v766
        %v1050 = vunpack.c.l.b16 %v767
        %v1051 = vunpack.c.h.b16 %v767
        %v1052 = vunpack.c.l.b16 %v768
        %v1053 = vunpack.c.h.b16 %v768
        %v1054 = vunpack.c.l.b16 %v769
        %v1055 = vunpack.c.h.b16 %v769
        %v1056 = vunpack.c.l.b16 %v770
        %v1057 = vunpack.c.h.b16 %v770
        %v1058 = vunpack.c.l.b16 %v771
        %v1059 = vunpack.c.h.b16 %v771
        %v1060 = vpack.c.b16 %v874, %v868
        %v1061 = vpack.c.b16 %v875, %v869
        %v1062 = vpack.c.b16 %v876, %v870
        %v1063 = vpack.c.b16 %v877, %v871
        %v1064 = vpack.c.b16 %v878, %v872
        %v1065 = vpack.c.b16 %v879, %v873
        %v1066 = vpack.c.b16 %v886, %v880
        %v1067 = vpack.c.b16 %v887, %v881
        %v1068 = vpack.c.b16 %v888, %v882
        %v1069 = vpack.c.b16 %v889, %v883
        %v1070 = vpack.c.b16 %v890, %v884
        %v1071 = vpack.c.b16 %v891, %v885
        %v1072 = vpack.c.b16 %v898, %v892
        %v1073 = vpack.c.b16 %v899, %v893
        %v1074 = vpack.c.b16 %v900, %v894
        %v1075 = vpack.c.b16 %v901, %v895
        %v1076 = vpack.c.b16 %v902, %v896
        %v1077 = vpack.c.b16 %v903, %v897
        %v1078 = vpack.c.b16 %v910, %v904
        %v1079 = vpack.c.b16 %v911, %v905
        %v1080 = vpack.c.b16 %v912, %v906
        %v1081 = vpack.c.b16 %v913, %v907
        %v1082 = vpack.c.b16 %v914, %v908
        %v1083 = vpack.c.b16 %v915, %v909
        %v1084 = vpack.c.b16 %v922, %v916
        %v1085 = vpack.c.b16 %v923, %v917
        %v1086 = vpack.c.b16 %v924, %v918
        %v1087 = vpack.c.b16 %v925, %v919
        %v1088 = vpack.c.b16 %v926, %v920
        %v1089 = vpack.c.b16 %v927, %v921
        %v1090 = vpack.c.b16 %v934, %v928
        %v1091 = vpack.c.b16 %v935, %v929
        %v1092 = vpack.c.b16 %v936, %v930
        %v1093 = vpack.c.b16 %v937, %v931
        %v1094 = vpack.c.b16 %v938, %v932
        %v1095 = vpack.c.b16 %v939, %v933
        %v1096 = vpack.c.b16 %v946, %v940
        %v1097 = vpack.c.b16 %v947, %v941
        %v1098 = vpack.c.b16 %v948, %v942
        %v1099 = vpack.c.b16 %v949, %v943
        %v1100 = vpack.c.b16 %v950, %v944
        %v1101 = vpack.c.b16 %v951, %v945
        %v1102 = vpack.c.b16 %v958, %v952
        %v1103 = vpack.c.b16 %v959, %v953
        %v1104 = vpack.c.b16 %v960, %v954
        %v1105 = vpack.c.b16 %v961, %v955
        %v1106 = vpack.c.b16 %v962, %v956
        %v1107 = vpack.c.b16 %v963, %v957
        %v1108 = vpack.c.b16 %v970, %v964
        %v1109 = vpack.c.b16 %v971, %v965
        %v1110 = vpack.c.b16 %v972, %v966
        %v1111 = vpack.c.b16 %v973, %v967
        %v1112 = vpack.c.b16 %v974, %v968
        %v1113 = vpack.c.b16 %v975, %v969
        %v1114 = vpack.c.b16 %v982, %v976
        %v1115 = vpack.c.b16 %v983, %v977
        %v1116 = vpack.c.b16 %v984, %v978
        %v1117 = vpack.c.b16 %v985, %v979
        %v1118 = vpack.c.b16 %v986, %v980
        %v1119 = vpack.c.b16 %v987, %v981
        %v1120 = vpack.c.b16 %v994, %v988
        %v1121 = vpack.c.b16 %v995, %v989
        %v1122 = vpack.c.b16 %v996, %v990
        %v1123 = vpack.c.b16 %v997, %v991
        %v1124 = vpack.c.b16 %v998, %v992
        %v1125 = vpack.c.b16 %v999, %v993
        %v1126 = vpack.c.b16 %v1006, %v1000
        %v1127 = vpack.c.b16 %v1007, %v1001
        %v1128 = vpack.c.b16 %v1008, %v1002
        %v1129 = vpack.c.b16 %v1009, %v1003
        %v1130 = vpack.c.b16 %v1010, %v1004
        %v1131 = vpack.c.b16 %v1011, %v1005
        %v1132 = vpack.c.b16 %v1018, %v1012
        %v1133 = vpack.c.b16 %v1019, %v1013
        %v1134 = vpack.c.b16 %v1020, %v1014
        %v1135 = vpack.c.b16 %v1021, %v1015
        %v1136 = vpack.c.b16 %v1022, %v1016
        %v1137 = vpack.c.b16 %v1023, %v1017
        %v1138 = vpack.c.b16 %v1030, %v1024
        %v1139 = vpack.c.b16 %v1031, %v1025
        %v1140 = vpack.c.b16 %v1032, %v1026
        %v1141 = vpack.c.b16 %v1033, %v1027
        %v1142 = vpack.c.b16 %v1034, %v1028
        %v1143 = vpack.c.b16 %v1035, %v1029
        %v1144 = vpack.c.b16 %v1042, %v1036
        %v1145 = vpack.c.b16 %v1043, %v1037
        %v1146 = vpack.c.b16 %v1044, %v1038
        %v1147 = vpack.c.b16 %v1045, %v1039
        %v1148 = vpack.c.b16 %v1046, %v1040
        %v1149 = vpack.c.b16 %v1047, %v1041
        %v1150 = vpack.c.b16 %v1054, %v1048
        %v1151 = vpack.c.b16 %v1055, %v1049
        %v1152 = vpack.c.b16 %v1056, %v1050
        %v1153 = vpack.c.b16 %v1057, %v1051
        %v1154 = vpack.c.b16 %v1058, %v1052
        %v1155 = vpack.c.b16 %v1059, %v1053
        %1252 = vmatprep.subr.bf16.mxu0 %v1103
        %1253 = vmatpush1.bf16.msra.mxu0 %v1102
        %1254 = vmatprep.subr.bf16.mxu0 %v1097
        %1255 = vmatpush1.bf16.msra.mxu0 %v1096
        %1256 = vmatprep.subr.bf16.mxu0 %v1091
        %1257 = vmatpush1.bf16.msra.mxu0 %v1090
        %1258 = vmatprep.subr.bf16.mxu0 %v1085
        %1259 = vmatpush1.bf16.msra.mxu0 %v1084
        %1260 = vmatprep.subr.bf16.mxu0 %v1079
        %1261 = vmatpush1.bf16.msra.mxu0 %v1078
        %1262 = vmatprep.subr.bf16.mxu0 %v1073
        %1263 = vmatpush1.bf16.msra.mxu0 %v1072
        %1264 = vmatprep.subr.bf16.mxu0 %v1067
        %1265 = vmatpush1.bf16.msra.mxu0 %v1066
        %1266 = vmatprep.subr.bf16.mxu0 %v1061
        %1267 = vmatpush1.bf16.msra.mxu0 %v1060
        %1268 = vmatprep.subr.bf16.mxu0 %v1151
        %1269 = vmatpush2.bf16.msra.mxu0 %v1150
        %1270 = vmatprep.subr.bf16.mxu0 %v1145
        %1271 = vmatpush2.bf16.msra.mxu0 %v1144
        %1272 = vmatprep.subr.bf16.mxu0 %v1139
        %1273 = vmatpush2.bf16.msra.mxu0 %v1138
        %1274 = vmatprep.subr.bf16.mxu0 %v1133
        %1275 = vmatpush2.bf16.msra.mxu0 %v1132
        %1276 = vmatprep.subr.bf16.mxu0 %v1127
        %1277 = vmatpush2.bf16.msra.mxu0 %v1126
        %1278 = vmatprep.subr.bf16.mxu0 %v1121
        %1279 = vmatpush2.bf16.msra.mxu0 %v1120
        %1280 = vmatprep.subr.bf16.mxu0 %v1115
        %1281 = vmatpush2.bf16.msra.mxu0 %v1114
        %1282 = vmatprep.subr.bf16.mxu0 %v1109
        %1283 = vmatpush2.bf16.msra.mxu0 %v1108
        %1284 = vmatprep.mubr.bf16.mxu0 %v661
        %1285 = vmatmul.mubr.bf16.gmra.mxu0 %v660
        %v1286 = vpop.f32.mrf.mxu0
        %v1287 = vadd.f32 0.0, %v1286
        %v1288 = vpop.f32.mrf.mxu0
        %v1289 = vadd.f32 0.0, %v1288
        %v1290 = vpop.f32.mrf.mxu0
        %v1291 = vadd.f32 0.0, %v1290
        %v1292 = vpop.f32.mrf.mxu0
        %v1293 = vadd.f32 0.0, %v1292
        %1294 = vmatprep.mubr.bf16.mxu0 %v663
        %1295 = vmatmul.mubr.bf16.gmra.mxu0 %v662
        %v1296 = vpop.f32.mrf.mxu0
        %v1297 = vadd.f32 0.0, %v1296
        %v1298 = vpop.f32.mrf.mxu0
        %v1299 = vadd.f32 0.0, %v1298
        %v1300 = vpop.f32.mrf.mxu0
        %v1301 = vadd.f32 0.0, %v1300
        %v1302 = vpop.f32.mrf.mxu0
        %v1303 = vadd.f32 0.0, %v1302
        %1304 = vmatprep.mubr.bf16.mxu0 %v665
        %1305 = vmatmul.mubr.bf16.gmra.mxu0 %v664
        %v1306 = vpop.f32.mrf.mxu0
        %v1307 = vadd.f32 0.0, %v1306
        %v1308 = vpop.f32.mrf.mxu0
        %v1309 = vadd.f32 0.0, %v1308
        %v1310 = vpop.f32.mrf.mxu0
        %v1311 = vadd.f32 0.0, %v1310
        %v1312 = vpop.f32.mrf.mxu0
        %v1313 = vadd.f32 0.0, %v1312
        %1314 = vmatprep.mubr.bf16.mxu0 %v667
        %1315 = vmatmul.mubr.bf16.gmra.mxu0 %v666
        %v1316 = vpop.f32.mrf.mxu0
        %v1317 = vadd.f32 0.0, %v1316
        %v1318 = vpop.f32.mrf.mxu0
        %v1319 = vadd.f32 0.0, %v1318
        %v1320 = vpop.f32.mrf.mxu0
        %v1321 = vadd.f32 0.0, %v1320
        %v1322 = vpop.f32.mrf.mxu0
        %v1323 = vadd.f32 0.0, %v1322
        %1324 = vmatprep.mubr.bf16.mxu0 %v669
        %1325 = vmatmul.mubr.bf16.gmra.mxu0 %v668
        %v1326 = vpop.f32.mrf.mxu0
        %v1327 = vadd.f32 0.0, %v1326
        %v1328 = vpop.f32.mrf.mxu0
        %v1329 = vadd.f32 0.0, %v1328
        %v1330 = vpop.f32.mrf.mxu0
        %v1331 = vadd.f32 0.0, %v1330
        %v1332 = vpop.f32.mrf.mxu0
        %v1333 = vadd.f32 0.0, %v1332
        %1334 = vmatprep.mubr.bf16.mxu0 %v671
        %1335 = vmatmul.mubr.bf16.gmra.mxu0 %v670
        %v1336 = vpop.f32.mrf.mxu0
        %v1337 = vadd.f32 0.0, %v1336
        %v1338 = vpop.f32.mrf.mxu0
        %v1339 = vadd.f32 0.0, %v1338
        %v1340 = vpop.f32.mrf.mxu0
        %v1341 = vadd.f32 0.0, %v1340
        %v1342 = vpop.f32.mrf.mxu0
        %v1343 = vadd.f32 0.0, %v1342
        %1344 = vmatprep.mubr.bf16.mxu0 %v673
        %1345 = vmatmul.mubr.bf16.gmra.mxu0 %v672
        %v1346 = vpop.f32.mrf.mxu0
        %v1347 = vadd.f32 0.0, %v1346
        %v1348 = vpop.f32.mrf.mxu0
        %v1349 = vadd.f32 0.0, %v1348
        %v1350 = vpop.f32.mrf.mxu0
        %v1351 = vadd.f32 0.0, %v1350
        %v1352 = vpop.f32.mrf.mxu0
        %v1353 = vadd.f32 0.0, %v1352
        %1354 = vmatprep.mubr.bf16.mxu0 %v675
        %1355 = vmatmul.mubr.bf16.gmra.mxu0 %v674
        %v1356 = vpop.f32.mrf.mxu0
        %v1357 = vadd.f32 0.0, %v1356
        %v1358 = vpop.f32.mrf.mxu0
        %v1359 = vadd.f32 0.0, %v1358
        %v1360 = vpop.f32.mrf.mxu0
        %v1361 = vadd.f32 0.0, %v1360
        %v1362 = vpop.f32.mrf.mxu0
        %v1363 = vadd.f32 0.0, %v1362
        %1364 = vdwg.mxu0
        %1365 = vmatprep.subr.bf16.mxu0 %v1105
        %1366 = vmatpush1.bf16.msra.mxu0 %v1104
        %1367 = vmatprep.subr.bf16.mxu0 %v1099
        %1368 = vmatpush1.bf16.msra.mxu0 %v1098
        %1369 = vmatprep.subr.bf16.mxu0 %v1093
        %1370 = vmatpush1.bf16.msra.mxu0 %v1092
        %1371 = vmatprep.subr.bf16.mxu0 %v1087
        %1372 = vmatpush1.bf16.msra.mxu0 %v1086
        %1373 = vmatprep.subr.bf16.mxu0 %v1081
        %1374 = vmatpush1.bf16.msra.mxu0 %v1080
        %1375 = vmatprep.subr.bf16.mxu0 %v1075
        %1376 = vmatpush1.bf16.msra.mxu0 %v1074
        %1377 = vmatprep.subr.bf16.mxu0 %v1069
        %1378 = vmatpush1.bf16.msra.mxu0 %v1068
        %1379 = vmatprep.subr.bf16.mxu0 %v1063
        %1380 = vmatpush1.bf16.msra.mxu0 %v1062
        %1381 = vmatprep.subr.bf16.mxu0 %v1153
        %1382 = vmatpush2.bf16.msra.mxu0 %v1152
        %1383 = vmatprep.subr.bf16.mxu0 %v1147
        %1384 = vmatpush2.bf16.msra.mxu0 %v1146
        %1385 = vmatprep.subr.bf16.mxu0 %v1141
        %1386 = vmatpush2.bf16.msra.mxu0 %v1140
        %1387 = vmatprep.subr.bf16.mxu0 %v1135
        %1388 = vmatpush2.bf16.msra.mxu0 %v1134
        %1389 = vmatprep.subr.bf16.mxu0 %v1129
        %1390 = vmatpush2.bf16.msra.mxu0 %v1128
        %1391 = vmatprep.subr.bf16.mxu0 %v1123
        %1392 = vmatpush2.bf16.msra.mxu0 %v1122
        %1393 = vmatprep.subr.bf16.mxu0 %v1117
        %1394 = vmatpush2.bf16.msra.mxu0 %v1116
        %1395 = vmatprep.subr.bf16.mxu0 %v1111
        %1396 = vmatpush2.bf16.msra.mxu0 %v1110
        %1397 = vmatprep.mubr.bf16.mxu0 %v661
        %1398 = vmatmul.mubr.bf16.gmra.mxu0 %v660
        %v1399 = vpop.f32.mrf.mxu0
        %v1400 = vadd.f32 0.0, %v1399
        %v1401 = vpop.f32.mrf.mxu0
        %v1402 = vadd.f32 0.0, %v1401
        %v1403 = vpop.f32.mrf.mxu0
        %v1404 = vadd.f32 0.0, %v1403
        %v1405 = vpop.f32.mrf.mxu0
        %v1406 = vadd.f32 0.0, %v1405
        %1407 = vmatprep.mubr.bf16.mxu0 %v663
        %1408 = vmatmul.mubr.bf16.gmra.mxu0 %v662
        %v1409 = vpop.f32.mrf.mxu0
        %v1410 = vadd.f32 0.0, %v1409
        %v1411 = vpop.f32.mrf.mxu0
        %v1412 = vadd.f32 0.0, %v1411
        %v1413 = vpop.f32.mrf.mxu0
        %v1414 = vadd.f32 0.0, %v1413
        %v1415 = vpop.f32.mrf.mxu0
        %v1416 = vadd.f32 0.0, %v1415
        %1417 = vmatprep.mubr.bf16.mxu0 %v665
        %1418 = vmatmul.mubr.bf16.gmra.mxu0 %v664
        %v1419 = vpop.f32.mrf.mxu0
        %v1420 = vadd.f32 0.0, %v1419
        %v1421 = vpop.f32.mrf.mxu0
        %v1422 = vadd.f32 0.0, %v1421
        %v1423 = vpop.f32.mrf.mxu0
        %v1424 = vadd.f32 0.0, %v1423
        %v1425 = vpop.f32.mrf.mxu0
        %v1426 = vadd.f32 0.0, %v1425
        %1427 = vmatprep.mubr.bf16.mxu0 %v667
        %1428 = vmatmul.mubr.bf16.gmra.mxu0 %v666
        %v1429 = vpop.f32.mrf.mxu0
        %v1430 = vadd.f32 0.0, %v1429
        %v1431 = vpop.f32.mrf.mxu0
        %v1432 = vadd.f32 0.0, %v1431
        %v1433 = vpop.f32.mrf.mxu0
        %v1434 = vadd.f32 0.0, %v1433
        %v1435 = vpop.f32.mrf.mxu0
        %v1436 = vadd.f32 0.0, %v1435
        %1437 = vmatprep.mubr.bf16.mxu0 %v669
        %1438 = vmatmul.mubr.bf16.gmra.mxu0 %v668
        %v1439 = vpop.f32.mrf.mxu0
        %v1440 = vadd.f32 0.0, %v1439
        %v1441 = vpop.f32.mrf.mxu0
        %v1442 = vadd.f32 0.0, %v1441
        %v1443 = vpop.f32.mrf.mxu0
        %v1444 = vadd.f32 0.0, %v1443
        %v1445 = vpop.f32.mrf.mxu0
        %v1446 = vadd.f32 0.0, %v1445
        %1447 = vmatprep.mubr.bf16.mxu0 %v671
        %1448 = vmatmul.mubr.bf16.gmra.mxu0 %v670
        %v1449 = vpop.f32.mrf.mxu0
        %v1450 = vadd.f32 0.0, %v1449
        %v1451 = vpop.f32.mrf.mxu0
        %v1452 = vadd.f32 0.0, %v1451
        %v1453 = vpop.f32.mrf.mxu0
        %v1454 = vadd.f32 0.0, %v1453
        %v1455 = vpop.f32.mrf.mxu0
        %v1456 = vadd.f32 0.0, %v1455
        %1457 = vmatprep.mubr.bf16.mxu0 %v673
        %1458 = vmatmul.mubr.bf16.gmra.mxu0 %v672
        %v1459 = vpop.f32.mrf.mxu0
        %v1460 = vadd.f32 0.0, %v1459
        %v1461 = vpop.f32.mrf.mxu0
        %v1462 = vadd.f32 0.0, %v1461
        %v1463 = vpop.f32.mrf.mxu0
        %v1464 = vadd.f32 0.0, %v1463
        %v1465 = vpop.f32.mrf.mxu0
        %v1466 = vadd.f32 0.0, %v1465
        %1467 = vmatprep.mubr.bf16.mxu0 %v675
        %1468 = vmatmul.mubr.bf16.gmra.mxu0 %v674
        %v1469 = vpop.f32.mrf.mxu0
        %v1470 = vadd.f32 0.0, %v1469
        %v1471 = vpop.f32.mrf.mxu0
        %v1472 = vadd.f32 0.0, %v1471
        %v1473 = vpop.f32.mrf.mxu0
        %v1474 = vadd.f32 0.0, %v1473
        %v1475 = vpop.f32.mrf.mxu0
        %v1476 = vadd.f32 0.0, %v1475
        %1477 = vdwg.mxu0
        %1478 = vmatprep.subr.bf16.mxu0 %v1107
        %1479 = vmatpush1.bf16.msra.mxu0 %v1106
        %1480 = vmatprep.subr.bf16.mxu0 %v1101
        %1481 = vmatpush1.bf16.msra.mxu0 %v1100
        %1482 = vmatprep.subr.bf16.mxu0 %v1095
        %1483 = vmatpush1.bf16.msra.mxu0 %v1094
        %1484 = vmatprep.subr.bf16.mxu0 %v1089
        %1485 = vmatpush1.bf16.msra.mxu0 %v1088
        %1486 = vmatprep.subr.bf16.mxu0 %v1083
        %1487 = vmatpush1.bf16.msra.mxu0 %v1082
        %1488 = vmatprep.subr.bf16.mxu0 %v1077
        %1489 = vmatpush1.bf16.msra.mxu0 %v1076
        %1490 = vmatprep.subr.bf16.mxu0 %v1071
        %1491 = vmatpush1.bf16.msra.mxu0 %v1070
        %1492 = vmatprep.subr.bf16.mxu0 %v1065
        %1493 = vmatpush1.bf16.msra.mxu0 %v1064
        %1494 = vmatprep.subr.bf16.mxu0 %v1155
        %1495 = vmatpush2.bf16.msra.mxu0 %v1154
        %1496 = vmatprep.subr.bf16.mxu0 %v1149
        %1497 = vmatpush2.bf16.msra.mxu0 %v1148
        %1498 = vmatprep.subr.bf16.mxu0 %v1143
        %1499 = vmatpush2.bf16.msra.mxu0 %v1142
        %1500 = vmatprep.subr.bf16.mxu0 %v1137
        %1501 = vmatpush2.bf16.msra.mxu0 %v1136
        %1502 = vmatprep.subr.bf16.mxu0 %v1131
        %1503 = vmatpush2.bf16.msra.mxu0 %v1130
        %1504 = vmatprep.subr.bf16.mxu0 %v1125
        %1505 = vmatpush2.bf16.msra.mxu0 %v1124
        %1506 = vmatprep.subr.bf16.mxu0 %v1119
        %1507 = vmatpush2.bf16.msra.mxu0 %v1118
        %1508 = vmatprep.subr.bf16.mxu0 %v1113
        %1509 = vmatpush2.bf16.msra.mxu0 %v1112
        %1510 = vmatprep.mubr.bf16.mxu0 %v661
        %1511 = vmatmul.mubr.bf16.gmra.mxu0 %v660
        %v1512 = vpop.f32.mrf.mxu0
        %v1513 = vadd.f32 0.0, %v1512
        %v1514 = vpop.f32.mrf.mxu0
        %v1515 = vadd.f32 0.0, %v1514
        %v1516 = vpop.f32.mrf.mxu0
        %v1517 = vadd.f32 0.0, %v1516
        %v1518 = vpop.f32.mrf.mxu0
        %v1519 = vadd.f32 0.0, %v1518
        %1520 = vmatprep.mubr.bf16.mxu0 %v663
        %1521 = vmatmul.mubr.bf16.gmra.mxu0 %v662
        %v1522 = vpop.f32.mrf.mxu0
        %v1523 = vadd.f32 0.0, %v1522
        %v1524 = vpop.f32.mrf.mxu0
        %v1525 = vadd.f32 0.0, %v1524
        %v1526 = vpop.f32.mrf.mxu0
        %v1527 = vadd.f32 0.0, %v1526
        %v1528 = vpop.f32.mrf.mxu0
        %v1529 = vadd.f32 0.0, %v1528
        %1530 = vmatprep.mubr.bf16.mxu0 %v665
        %1531 = vmatmul.mubr.bf16.gmra.mxu0 %v664
        %v1532 = vpop.f32.mrf.mxu0
        %v1533 = vadd.f32 0.0, %v1532
        %v1534 = vpop.f32.mrf.mxu0
        %v1535 = vadd.f32 0.0, %v1534
        %v1536 = vpop.f32.mrf.mxu0
        %v1537 = vadd.f32 0.0, %v1536
        %v1538 = vpop.f32.mrf.mxu0
        %v1539 = vadd.f32 0.0, %v1538
        %1540 = vmatprep.mubr.bf16.mxu0 %v667
        %1541 = vmatmul.mubr.bf16.gmra.mxu0 %v666
        %v1542 = vpop.f32.mrf.mxu0
        %v1543 = vadd.f32 0.0, %v1542
        %v1544 = vpop.f32.mrf.mxu0
        %v1545 = vadd.f32 0.0, %v1544
        %v1546 = vpop.f32.mrf.mxu0
        %v1547 = vadd.f32 0.0, %v1546
        %v1548 = vpop.f32.mrf.mxu0
        %v1549 = vadd.f32 0.0, %v1548
        %1550 = vmatprep.mubr.bf16.mxu0 %v669
        %1551 = vmatmul.mubr.bf16.gmra.mxu0 %v668
        %v1552 = vpop.f32.mrf.mxu0
        %v1553 = vadd.f32 0.0, %v1552
        %v1554 = vpop.f32.mrf.mxu0
        %v1555 = vadd.f32 0.0, %v1554
        %v1556 = vpop.f32.mrf.mxu0
        %v1557 = vadd.f32 0.0, %v1556
        %v1558 = vpop.f32.mrf.mxu0
        %v1559 = vadd.f32 0.0, %v1558
        %1560 = vmatprep.mubr.bf16.mxu0 %v671
        %1561 = vmatmul.mubr.bf16.gmra.mxu0 %v670
        %v1562 = vpop.f32.mrf.mxu0
        %v1563 = vadd.f32 0.0, %v1562
        %v1564 = vpop.f32.mrf.mxu0
        %v1565 = vadd.f32 0.0, %v1564
        %v1566 = vpop.f32.mrf.mxu0
        %v1567 = vadd.f32 0.0, %v1566
        %v1568 = vpop.f32.mrf.mxu0
        %v1569 = vadd.f32 0.0, %v1568
        %1570 = vmatprep.mubr.bf16.mxu0 %v673
        %1571 = vmatmul.mubr.bf16.gmra.mxu0 %v672
        %v1572 = vpop.f32.mrf.mxu0
        %v1573 = vadd.f32 0.0, %v1572
        %v1574 = vpop.f32.mrf.mxu0
        %v1575 = vadd.f32 0.0, %v1574
        %v1576 = vpop.f32.mrf.mxu0
        %v1577 = vadd.f32 0.0, %v1576
        %v1578 = vpop.f32.mrf.mxu0
        %v1579 = vadd.f32 0.0, %v1578
        %1580 = vmatprep.mubr.bf16.mxu0 %v675
        %1581 = vmatmul.mubr.bf16.gmra.mxu0 %v674
        %v1582 = vpop.f32.mrf.mxu0
        %v1583 = vadd.f32 0.0, %v1582
        %v1584 = vpop.f32.mrf.mxu0
        %v1585 = vadd.f32 0.0, %v1584
        %v1586 = vpop.f32.mrf.mxu0
        %v1587 = vadd.f32 0.0, %v1586
        %v1588 = vpop.f32.mrf.mxu0
        %v1589 = vadd.f32 0.0, %v1588
        %1590 = vdwg.mxu0
        %v1591 = vpack.c.bf16 %v1291, %v1287
        %v1592 = vpack.c.bf16 %v1293, %v1289
        %v1593 = vpack.c.bf16 %v1404, %v1400
        %v1594 = vpack.c.bf16 %v1406, %v1402
        %v1595 = vpack.c.bf16 %v1517, %v1513
        %v1596 = vpack.c.bf16 %v1519, %v1515
        %v1597 = vpack.c.bf16 %v1301, %v1297
        %v1598 = vpack.c.bf16 %v1303, %v1299
        %v1599 = vpack.c.bf16 %v1414, %v1410
        %v1600 = vpack.c.bf16 %v1416, %v1412
        %v1601 = vpack.c.bf16 %v1527, %v1523
        %v1602 = vpack.c.bf16 %v1529, %v1525
        %v1603 = vpack.c.bf16 %v1311, %v1307
        %v1604 = vpack.c.bf16 %v1313, %v1309
        %v1605 = vpack.c.bf16 %v1424, %v1420
        %v1606 = vpack.c.bf16 %v1426, %v1422
        %v1607 = vpack.c.bf16 %v1537, %v1533
        %v1608 = vpack.c.bf16 %v1539, %v1535
        %v1609 = vpack.c.bf16 %v1321, %v1317
        %v1610 = vpack.c.bf16 %v1323, %v1319
        %v1611 = vpack.c.bf16 %v1434, %v1430
        %v1612 = vpack.c.bf16 %v1436, %v1432
        %v1613 = vpack.c.bf16 %v1547, %v1543
        %v1614 = vpack.c.bf16 %v1549, %v1545
        %v1615 = vpack.c.bf16 %v1331, %v1327
        %v1616 = vpack.c.bf16 %v1333, %v1329
        %v1617 = vpack.c.bf16 %v1444, %v1440
        %v1618 = vpack.c.bf16 %v1446, %v1442
        %v1619 = vpack.c.bf16 %v1557, %v1553
        %v1620 = vpack.c.bf16 %v1559, %v1555
        %v1621 = vpack.c.bf16 %v1341, %v1337
        %v1622 = vpack.c.bf16 %v1343, %v1339
        %v1623 = vpack.c.bf16 %v1454, %v1450
        %v1624 = vpack.c.bf16 %v1456, %v1452
        %v1625 = vpack.c.bf16 %v1567, %v1563
        %v1626 = vpack.c.bf16 %v1569, %v1565
        %v1627 = vpack.c.bf16 %v1351, %v1347
        %v1628 = vpack.c.bf16 %v1353, %v1349
        %v1629 = vpack.c.bf16 %v1464, %v1460
        %v1630 = vpack.c.bf16 %v1466, %v1462
        %v1631 = vpack.c.bf16 %v1577, %v1573
        %v1632 = vpack.c.bf16 %v1579, %v1575
        %v1633 = vpack.c.bf16 %v1361, %v1357
        %v1634 = vpack.c.bf16 %v1363, %v1359
        %v1635 = vpack.c.bf16 %v1474, %v1470
        %v1636 = vpack.c.bf16 %v1476, %v1472
        %v1637 = vpack.c.bf16 %v1587, %v1583
        %v1638 = vpack.c.bf16 %v1589, %v1585
        %v1687 = vunpack.c.l.b16 %v1591
        %v1688 = vunpack.c.l.b16 %v1592
        %v1689 = vunpack.c.l.b16 %v1593
        %v1690 = vunpack.c.l.b16 %v1594
        %v1691 = vunpack.c.l.b16 %v1595
        %v1692 = vunpack.c.l.b16 %v1596
        %v1693 = vunpack.c.h.b16 %v1591
        %v1694 = vunpack.c.h.b16 %v1592
        %v1695 = vunpack.c.h.b16 %v1593
        %v1696 = vunpack.c.h.b16 %v1594
        %v1697 = vunpack.c.h.b16 %v1595
        %v1698 = vunpack.c.h.b16 %v1596
        %v1699 = vunpack.c.l.b16 %v1597
        %v1700 = vunpack.c.l.b16 %v1598
        %v1701 = vunpack.c.l.b16 %v1599
        %v1702 = vunpack.c.l.b16 %v1600
        %v1703 = vunpack.c.l.b16 %v1601
        %v1704 = vunpack.c.l.b16 %v1602
        %v1705 = vunpack.c.h.b16 %v1597
        %v1706 = vunpack.c.h.b16 %v1598
        %v1707 = vunpack.c.h.b16 %v1599
        %v1708 = vunpack.c.h.b16 %v1600
        %v1709 = vunpack.c.h.b16 %v1601
        %v1710 = vunpack.c.h.b16 %v1602
        %v1711 = vunpack.c.l.b16 %v1603
        %v1712 = vunpack.c.l.b16 %v1604
        %v1713 = vunpack.c.l.b16 %v1605
        %v1714 = vunpack.c.l.b16 %v1606
        %v1715 = vunpack.c.l.b16 %v1607
        %v1716 = vunpack.c.l.b16 %v1608
        %v1717 = vunpack.c.h.b16 %v1603
        %v1718 = vunpack.c.h.b16 %v1604
        %v1719 = vunpack.c.h.b16 %v1605
        %v1720 = vunpack.c.h.b16 %v1606
        %v1721 = vunpack.c.h.b16 %v1607
        %v1722 = vunpack.c.h.b16 %v1608
        %v1723 = vunpack.c.l.b16 %v1609
        %v1724 = vunpack.c.l.b16 %v1610
        %v1725 = vunpack.c.l.b16 %v1611
        %v1726 = vunpack.c.l.b16 %v1612
        %v1727 = vunpack.c.l.b16 %v1613
        %v1728 = vunpack.c.l.b16 %v1614
        %v1729 = vunpack.c.h.b16 %v1609
        %v1730 = vunpack.c.h.b16 %v1610
        %v1731 = vunpack.c.h.b16 %v1611
        %v1732 = vunpack.c.h.b16 %v1612
        %v1733 = vunpack.c.h.b16 %v1613
        %v1734 = vunpack.c.h.b16 %v1614
        %v1735 = vunpack.c.l.b16 %v1615
        %v1736 = vunpack.c.l.b16 %v1616
        %v1737 = vunpack.c.l.b16 %v1617
        %v1738 = vunpack.c.l.b16 %v1618
        %v1739 = vunpack.c.l.b16 %v1619
        %v1740 = vunpack.c.l.b16 %v1620
        %v1741 = vunpack.c.h.b16 %v1615
        %v1742 = vunpack.c.h.b16 %v1616
        %v1743 = vunpack.c.h.b16 %v1617
        %v1744 = vunpack.c.h.b16 %v1618
        %v1745 = vunpack.c.h.b16 %v1619
        %v1746 = vunpack.c.h.b16 %v1620
        %v1747 = vunpack.c.l.b16 %v1621
        %v1748 = vunpack.c.l.b16 %v1622
        %v1749 = vunpack.c.l.b16 %v1623
        %v1750 = vunpack.c.l.b16 %v1624
        %v1751 = vunpack.c.l.b16 %v1625
        %v1752 = vunpack.c.l.b16 %v1626
        %v1753 = vunpack.c.h.b16 %v1621
        %v1754 = vunpack.c.h.b16 %v1622
        %v1755 = vunpack.c.h.b16 %v1623
        %v1756 = vunpack.c.h.b16 %v1624
        %v1757 = vunpack.c.h.b16 %v1625
        %v1758 = vunpack.c.h.b16 %v1626
        %v1759 = vunpack.c.l.b16 %v1627
        %v1760 = vunpack.c.l.b16 %v1628
        %v1761 = vunpack.c.l.b16 %v1629
        %v1762 = vunpack.c.l.b16 %v1630
        %v1763 = vunpack.c.l.b16 %v1631
        %v1764 = vunpack.c.l.b16 %v1632
        %v1765 = vunpack.c.h.b16 %v1627
        %v1766 = vunpack.c.h.b16 %v1628
        %v1767 = vunpack.c.h.b16 %v1629
        %v1768 = vunpack.c.h.b16 %v1630
        %v1769 = vunpack.c.h.b16 %v1631
        %v1770 = vunpack.c.h.b16 %v1632
        %v1771 = vunpack.c.l.b16 %v1633
        %v1772 = vunpack.c.l.b16 %v1634
        %v1773 = vunpack.c.l.b16 %v1635
        %v1774 = vunpack.c.l.b16 %v1636
        %v1775 = vunpack.c.l.b16 %v1637
        %v1776 = vunpack.c.l.b16 %v1638
        %v1777 = vunpack.c.h.b16 %v1633
        %v1778 = vunpack.c.h.b16 %v1634
        %v1779 = vunpack.c.h.b16 %v1635
        %v1780 = vunpack.c.h.b16 %v1636
        %v1781 = vunpack.c.h.b16 %v1637
        %v1782 = vunpack.c.h.b16 %v1638
        %v1783 = vpack.c.b16 %v1688, %v1687
        %v1784 = vpack.c.b16 %v1690, %v1689
        %v1785 = vpack.c.b16 %v1692, %v1691
        %v1786 = vpack.c.b16 %v1694, %v1693
        %v1787 = vpack.c.b16 %v1696, %v1695
        %v1788 = vpack.c.b16 %v1698, %v1697
        %v1789 = vpack.c.b16 %v1700, %v1699
        %v1790 = vpack.c.b16 %v1702, %v1701
        %v1791 = vpack.c.b16 %v1704, %v1703
        %v1792 = vpack.c.b16 %v1706, %v1705
        %v1793 = vpack.c.b16 %v1708, %v1707
        %v1794 = vpack.c.b16 %v1710, %v1709
        %v1795 = vpack.c.b16 %v1712, %v1711
        %v1796 = vpack.c.b16 %v1714, %v1713
        %v1797 = vpack.c.b16 %v1716, %v1715
        %v1798 = vpack.c.b16 %v1718, %v1717
        %v1799 = vpack.c.b16 %v1720, %v1719
        %v1800 = vpack.c.b16 %v1722, %v1721
        %v1801 = vpack.c.b16 %v1724, %v1723
        %v1802 = vpack.c.b16 %v1726, %v1725
        %v1803 = vpack.c.b16 %v1728, %v1727
        %v1804 = vpack.c.b16 %v1730, %v1729
        %v1805 = vpack.c.b16 %v1732, %v1731
        %v1806 = vpack.c.b16 %v1734, %v1733
        %v1807 = vpack.c.b16 %v1736, %v1735
        %v1808 = vpack.c.b16 %v1738, %v1737
        %v1809 = vpack.c.b16 %v1740, %v1739
        %v1810 = vpack.c.b16 %v1742, %v1741
        %v1811 = vpack.c.b16 %v1744, %v1743
        %v1812 = vpack.c.b16 %v1746, %v1745
        %v1813 = vpack.c.b16 %v1748, %v1747
        %v1814 = vpack.c.b16 %v1750, %v1749
        %v1815 = vpack.c.b16 %v1752, %v1751
        %v1816 = vpack.c.b16 %v1754, %v1753
        %v1817 = vpack.c.b16 %v1756, %v1755
        %v1818 = vpack.c.b16 %v1758, %v1757
        %v1819 = vpack.c.b16 %v1760, %v1759
        %v1820 = vpack.c.b16 %v1762, %v1761
        %v1821 = vpack.c.b16 %v1764, %v1763
        %v1822 = vpack.c.b16 %v1766, %v1765
        %v1823 = vpack.c.b16 %v1768, %v1767
        %v1824 = vpack.c.b16 %v1770, %v1769
        %v1825 = vpack.c.b16 %v1772, %v1771
        %v1826 = vpack.c.b16 %v1774, %v1773
        %v1827 = vpack.c.b16 %v1776, %v1775
        %v1828 = vpack.c.b16 %v1778, %v1777
        %v1829 = vpack.c.b16 %v1780, %v1779
        %v1830 = vpack.c.b16 %v1782, %v1781
        %1879 = vst [vmem:[%s278] sm:$0xff] %v1783
        %1880 = vst [vmem:[%s278 + $0x8] sm:$0xff] %v1784
        %1881 = vst [vmem:[%s278 + $0x10] sm:$0xff] %v1785
        %1882 = vst [vmem:[%s278 + $0x18] sm:$0xff] %v1786
        %1883 = vst [vmem:[%s278 + $0x20] sm:$0xff] %v1787
        %1884 = vst [vmem:[%s278 + $0x28] sm:$0xff] %v1788
        %1885 = vst [vmem:[%s278 + $0x30] sm:$0xff] %v1789
        %1886 = vst [vmem:[%s278 + $0x38] sm:$0xff] %v1790
        %1887 = vst [vmem:[%s278 + $0x40] sm:$0xff] %v1791
        %1888 = vst [vmem:[%s278 + $0x48] sm:$0xff] %v1792
        %1889 = vst [vmem:[%s278 + $0x50] sm:$0xff] %v1793
        %1890 = vst [vmem:[%s278 + $0x58] sm:$0xff] %v1794
        %1891 = vst [vmem:[%s278 + $0x60] sm:$0xff] %v1795
        %1892 = vst [vmem:[%s278 + $0x68] sm:$0xff] %v1796
        %1893 = vst [vmem:[%s278 + $0x70] sm:$0xff] %v1797
        %1894 = vst [vmem:[%s278 + $0x78] sm:$0xff] %v1798
        %1895 = vst [vmem:[%s278 + $0x80] sm:$0xff] %v1799
        %1896 = vst [vmem:[%s278 + $0x88] sm:$0xff] %v1800
        %1897 = vst [vmem:[%s278 + $0x90] sm:$0xff] %v1801
        %1898 = vst [vmem:[%s278 + $0x98] sm:$0xff] %v1802
        %1899 = vst [vmem:[%s278 + $0xa0] sm:$0xff] %v1803
        %1900 = vst [vmem:[%s278 + $0xa8] sm:$0xff] %v1804
        %1901 = vst [vmem:[%s278 + $0xb0] sm:$0xff] %v1805
        %1902 = vst [vmem:[%s278 + $0xb8] sm:$0xff] %v1806
        %1903 = vst [vmem:[%s278 + $0xc0] sm:$0xff] %v1807
        %1904 = vst [vmem:[%s278 + $0xc8] sm:$0xff] %v1808
        %1905 = vst [vmem:[%s278 + $0xd0] sm:$0xff] %v1809
        %1906 = vst [vmem:[%s278 + $0xd8] sm:$0xff] %v1810
        %1907 = vst [vmem:[%s278 + $0xe0] sm:$0xff] %v1811
        %1908 = vst [vmem:[%s278 + $0xe8] sm:$0xff] %v1812
        %1909 = vst [vmem:[%s278 + $0xf0] sm:$0xff] %v1813
        %1910 = vst [vmem:[%s278 + $0xf8] sm:$0xff] %v1814
        %1911 = vst [vmem:[%s278 + $0x100] sm:$0xff] %v1815
        %1912 = vst [vmem:[%s278 + $0x108] sm:$0xff] %v1816
        %1913 = vst [vmem:[%s278 + $0x110] sm:$0xff] %v1817
        %1914 = vst [vmem:[%s278 + $0x118] sm:$0xff] %v1818
        %1915 = vst [vmem:[%s278 + $0x120] sm:$0xff] %v1819
        %1916 = vst [vmem:[%s278 + $0x128] sm:$0xff] %v1820
        %1917 = vst [vmem:[%s278 + $0x130] sm:$0xff] %v1821
        %1918 = vst [vmem:[%s278 + $0x138] sm:$0xff] %v1822
        %1919 = vst [vmem:[%s278 + $0x140] sm:$0xff] %v1823
        %1920 = vst [vmem:[%s278 + $0x148] sm:$0xff] %v1824
        %1921 = vst [vmem:[%s278 + $0x150] sm:$0xff] %v1825
        %1922 = vst [vmem:[%s278 + $0x158] sm:$0xff] %v1826
        %1923 = vst [vmem:[%s278 + $0x160] sm:$0xff] %v1827
        %1924 = vst [vmem:[%s278 + $0x168] sm:$0xff] %v1828
        %1925 = vst [vmem:[%s278 + $0x170] sm:$0xff] %v1829
        %1926 = vst [vmem:[%s278 + $0x178] sm:$0xff] %v1830
        %s1927 = sand.u32 %s149, 1
        %s1928 = scalar_lea.sflag [#allocation4], %s1927
        %s1929 = sand.u32 %s149, 1
        %s1930 = smul.addr %s1929, 384
        %s1931 = scalar_lea.vmem [#allocation8], %s1930
        // Predicated region
        $region49: #{tpu_custom_call.1} parent=35 // pred_check
          %p1932 = pneg %p159
        $region50: #{tpu_custom_call.1} parent=35 // pred_check_branch
          %1934 = sbr.rel (%p1932) target = $region52
        $region51: #{tpu_custom_call.1} parent=35 // pred_region
          %s1935 = smul.u32 16, %s28
          %s1936 = smul.u32 6, %s29
          %s1938 = ssub.s32 6144, 6144
          %1939 = vsyncadd %s1928, %s1938
          %s1940 = smul.addr %s1935, 6
          %s1941 = sadd.s32 %s1936, %s1940
          %s1942 = smul.addr %s27, 192
          %s1943 = sadd.s32 %s1941, %s1942
          %s1944 = smul.addr %s1943, 64
          %s1945 = scalar_lea.hbm %s4, %s1944
          %s1946 = sshll.u32 %s1931, 4
          %s1947 = int_to_ptr.vmem [resolvable:$true] %s1946
          %1952 = dma.vmem_to_hbm [thread:$0]  %s1947, 6144, %s1945, %s1928, 384, 384, 24
        $region52: #{tpu_custom_call.1} parent=35 // pred_fallthru
          _
      $region36: #{tpu_custom_call.1} parent=5 // pred_fallthru
        _
      %p1953 = scmp.le.s32.totalorder 2, %s17
      // Predicated region
      $region53: #{tpu_custom_call.1} parent=5 // pred_check
        %p1954 = pneg %p1953
      $region54: #{tpu_custom_call.1} parent=5 // pred_check_branch
        %1956 = sbr.rel (%p1954) target = $region56
      $region55: #{tpu_custom_call.1} parent=5 // pred_region
        %s1957 = ssub.s32 %s17, 2
        // Predicated region
        $region57: #{tpu_custom_call.1} parent=55 // pred_check
          %p1958 = pneg %p165
        $region58: #{tpu_custom_call.1} parent=55 // pred_check_branch
          %1960 = sbr.rel (%p1958) target = $region60
        $region59: #{tpu_custom_call.1} parent=55 // pred_region
          %s1961 = sand.u32 %s150, 1
          %s1962 = scalar_lea.sflag [#allocation4], %s1961
          %s1963 = sand.u32 %s150, 1
          %s1964 = smul.addr %s1963, 384
          %s1965 = scalar_lea.vmem [#allocation8], %s1964
          %1966 = dma.done %s1962, 6144
        $region60: #{tpu_custom_call.1} parent=55 // pred_fallthru
          _
      $region56: #{tpu_custom_call.1} parent=5 // pred_fallthru
        _
    $region6: #{tpu_custom_call.1} parent=1 // loop_footer
      %s21 = sadd.s32 1, %s17
    $region7: #{tpu_custom_call.1} parent=1 // loop_footer_branch
      %16 = sbr.rel target = $region3
    $region8: #{tpu_custom_call.1} parent=1 // loop_exit
      _
    %1967 = vsyncpa [#allocation3], 1
    %s1968 = scalar_lea.sflag [#allocation3], 1
    %1969 = vsyncpa %s1968, 1
    %1970 = vsyncpa [#allocation6], 1
    %1971 = vsyncpa [#allocation4], 1
    %s1972 = scalar_lea.sflag [#allocation4], 1
    %1973 = vsyncpa %s1972, 1

</llo_original>
